<compile_context>
chip_gen: v7x
topology: tpu7x:2x2x1
jax: 0.10.0
libtpu: 0.0.40
codegen_flags: <defaults>
</compile_context>

<pallas_src>
import jax
import jax.numpy as jnp
from jax.experimental import pallas as pl
from jax.experimental.pallas import tpu as pltpu

_LANE = 128                              # TPU vreg lane width
_SUBLANE_PACK = 32                       # rows multiple of 32 -> packed sublanes f32/bf16/i8
_MIN_PALLAS_ELEMS = 256 * 1024           # below this, XLA fusion of the tiny op wins
_VMEM_BUDGET_BYTES = 16 * 1024 * 1024    # total double-buffered pipeline footprint target
_VMEM_LIMIT_BYTES = 32 * 1024 * 1024     # explicit scoped-VMEM request (fits v5e/v6e/v7x physical)
_TARGET_MIN_BLOCKS = 4                   # >= 4 grid steps -> >= 2 blocks per TC on v7x megacore

# Purely elementwise lax primitives (safe to apply independently per block of
# an arbitrarily flattened slab).  Anything else -> plain-JAX fallback.
_ELEMENTWISE_PRIMS = frozenset({
    'abs', 'add', 'and', 'atan', 'atan2', 'cbrt', 'ceil', 'clamp', 'copy',
    'convert_element_type', 'cos', 'cosh', 'div', 'eq', 'erf', 'erfc', 'exp',
    'exp2', 'expm1', 'floor', 'ge', 'gt', 'integer_pow', 'is_finite', 'le',
    'log', 'log1p', 'logistic', 'lt', 'max', 'min', 'mul', 'ne', 'neg',
    'nextafter', 'not', 'or', 'pow', 'rem', 'round', 'rsqrt', 'select_n',
    'sign', 'sin', 'sinh', 'sqrt', 'square', 'stop_gradient', 'sub', 'tan',
    'tanh', 'xor',
})


def _pick_cols(total):
    """Widest lane-dense column count that divides `total` (needs total % 128 == 0)."""
    for c in (1024, 512, 256, 128):
        if total % c == 0:
            return c
    return None


def _jaxpr_is_elementwise(jaxpr):
    """True iff every primitive in `jaxpr` (recursively) is elementwise-safe."""
    for eqn in jaxpr.eqns:
        sub = eqn.params.get('jaxpr', None) or eqn.params.get('call_jaxpr', None)
        if sub is not None:
            inner = sub.jaxpr if hasattr(sub, 'jaxpr') else sub
            if not _jaxpr_is_elementwise(inner):
                return False
            continue
        name = eqn.primitive.name
        if name == 'broadcast_in_dim':
            # Broadcasting a scalar (e.g. the 1e-6 clamp constant) is fine.
            if eqn.invars[0].aval.shape not in ((), (1,)):
                return False
            continue
        if name not in _ELEMENTWISE_PRIMS:
            return False
    return True


def _elementwise_probe(expression_fn, arrs):
    """Return (is_elementwise, out_dtype) for expression_fn over same-shaped arrs."""
    shape = arrs[0].shape
    try:
        out_full = jax.eval_shape(expression_fn, *arrs)
        probe = [jnp.ones((8, _LANE), dtype=a.dtype) for a in arrs]
        out_probe = jax.eval_shape(expression_fn, *probe)
        shape_ok = (isinstance(out_full, jax.ShapeDtypeStruct)
                    and out_full.shape == shape
                    and isinstance(out_probe, jax.ShapeDtypeStruct)
                    and out_probe.shape == (8, _LANE))
        if not shape_ok:
            return False, None
        closed = jax.make_jaxpr(expression_fn)(*probe)
        if not _jaxpr_is_elementwise(closed.jaxpr):
            return False, None
        return True, out_full.dtype
    except Exception:
        return False, None


def _elementwise_pallas(expression_fn, out_dtype, donate, *xs2d):
    """Apply an elementwise expression_fn to same-shaped (rows, cols) slabs."""
    rows, cols = xs2d[0].shape
    n_in = len(xs2d)

    itemsize = max([jnp.dtype(a.dtype).itemsize for a in xs2d]
                   + [jnp.dtype(out_dtype).itemsize])
    # Budget: (n_in inputs + 1 output), each double-buffered by the pipeline.
    per_buffer_bytes = _VMEM_BUDGET_BYTES // (2 * (n_in + 1))
    rows_budget = max(_SUBLANE_PACK,
                      (per_buffer_bytes // (cols * itemsize)) // _SUBLANE_PACK * _SUBLANE_PACK)
    # Never collapse to a single block: keep >= _TARGET_MIN_BLOCKS grid steps so
    # the "parallel" axis can be sharded across both v7x TensorCores.
    rows_split = max(_SUBLANE_PACK,
                     (pl.cdiv(rows, _TARGET_MIN_BLOCKS) // _SUBLANE_PACK) * _SUBLANE_PACK)
    block_rows = min(rows_budget, rows_split, rows)

    grid = (pl.cdiv(rows, block_rows),)        # partial tail block is masked by Pallas

    def kernel(*refs):
        in_refs, o_ref = refs[:-1], refs[-1]
        o_ref[...] = expression_fn(*[r[...] for r in in_refs]).astype(o_ref.dtype)

    spec = pl.BlockSpec((block_rows, cols), lambda i: (i, 0))

    # Advisory cost hint for XLA's scheduler.
    bytes_accessed = (sum(int(a.size) * jnp.dtype(a.dtype).itemsize for a in xs2d)
                      + rows * cols * jnp.dtype(out_dtype).itemsize)
    try:
        cost = pl.estimate_cost(
            lambda *a: expression_fn(*a).astype(out_dtype), *xs2d)
    except Exception:
        cost = pl.CostEstimate(flops=rows * cols * max(1, n_in),
                               transcendentals=rows * cols,
                               bytes_accessed=bytes_accessed)

    # Reuse the (donated) input buffer for the output when legal.
    aliases = {}
    if donate and n_in == 1 and jnp.dtype(xs2d[0].dtype) == jnp.dtype(out_dtype):
        aliases = {0: 0}

    return pl.pallas_call(
        kernel,
        out_shape=jax.ShapeDtypeStruct((rows, cols), out_dtype),
        grid=grid,
        in_specs=[spec] * n_in,
        out_specs=spec,
        input_output_aliases=aliases,
        cost_estimate=cost,
        compiler_params=pltpu.CompilerParams(
            dimension_semantics=("parallel",),
            vmem_limit_bytes=_VMEM_LIMIT_BYTES,
        ),
    )(*xs2d)


def _apply_expression(expression_fn, *xs, donate=False):
    """Forward pass of Expression: expression_fn(*xs).

    The Pallas fast path is used only for the case CSPNet actually exercises:
    purely elementwise expressions over large, same-shaped, 128-aligned
    tensors.  Everything else falls back to plain JAX (identical semantics).
    """
    def fallback():
        return expression_fn(*xs)

    if not xs:
        return fallback()
    try:
        arrs = [jnp.asarray(a) for a in xs]
    except Exception:
        return fallback()

    shape = arrs[0].shape
    if any(a.shape != shape for a in arrs):
        return fallback()

    n = int(arrs[0].size)
    # Small ops: a standalone pallas_call would add a full HBM read+write that
    # XLA fusion with neighbouring ops (conv epilogue / pooling) avoids.
    if n < _MIN_PALLAS_ELEMS:
        return fallback()
    # Ragged sizes: pad/slice round-trips cost ~2 extra HBM passes -> not worth it.
    if n % _LANE != 0:
        return fallback()

    elementwise_ok, out_dtype = _elementwise_probe(expression_fn, arrs)
    if not elementwise_ok:
        return fallback()

    cols = _pick_cols(n)
    if cols is None:
        return fallback()
    rows = n // cols
    xs2d = [a.reshape(rows, cols) for a in arrs]

    out2d = _elementwise_pallas(expression_fn, out_dtype, donate, *xs2d)
    return out2d.reshape(shape)


class Expression:
    """JAX/Pallas port of torcheeg's Expression(nn.Module). No parameters.

    `donate_input=True` additionally aliases the (single) input buffer with the
    output on the Pallas path (valid only if the caller no longer needs it).
    """

    def __init__(self, expression_fn, donate_input=False):
        self.expression_fn = expression_fn
        self.donate_input = donate_input

    def __call__(self, *x):
        return _apply_expression(self.expression_fn, *x, donate=self.donate_input)

    def __repr__(self):
        if hasattr(self.expression_fn, 'func') and hasattr(self.expression_fn, 'kwargs'):
            expression_str = '{:s} {:s}'.format(self.expression_fn.func.__name__,
                                                str(self.expression_fn.kwargs))
        elif hasattr(self.expression_fn, '__name__'):
            expression_str = self.expression_fn.__name__
        else:
            expression_str = repr(self.expression_fn)
        return self.__class__.__name__ + '(expression=%s) ' % expression_str


def compose(*fns):
    """Compose unary expression_fns left-to-right: compose(f, g)(x) == g(f(x))."""
    def fused(*x):
        out = fns[0](*x)
        for fn in fns[1:]:
            out = fn(out)
        return out
    fused.__name__ = "_then_".join(getattr(f, '__name__', 'fn') for f in fns)
    return fused


def fuse_expressions(*exprs):
    """Fuse chained Expression modules into one (single HBM read+write)."""
    return Expression(compose(*[e.expression_fn for e in exprs]))


# --- the two expression_fns CSPNet actually wraps with Expression -----------
def square(x):
    return x * x


def safe_log(x):
    # log(clamp(x, min=1e-6)), as used after average pooling in CSPNet.
    return jnp.log(jnp.clip(x, 1e-6, None))


if __name__ == "__main__":
    key = jax.random.PRNGKey(0)
    k1, k2, k3, k4, k5 = jax.random.split(key, 5)

    square_mod = Expression(square)
    log_mod = Expression(safe_log)

    # 1) CSPNet-demo-sized activation: tiny -> plain-JAX fast path (no launch cost).
    x_small = jax.random.normal(k1, (2, 4, 16, 16), dtype=jnp.float32)
    y_small = jax.block_until_ready(log_mod(square_mod(x_small)))
    ref_small = jnp.log(jnp.clip(x_small * x_small, 1e-6, None))
    assert y_small.shape == x_small.shape and y_small.dtype == x_small.dtype
    assert jnp.allclose(y_small, ref_small, atol=1e-6, rtol=1e-6)

    # 2) Larger activation: Pallas kernel with a multi-block lane-dense grid
    #    (block capped so grid >= 4 for v7x megacore sharding).
    x_big = jax.random.normal(k2, (8, 32, 64, 128), dtype=jnp.float32)
    ref_big = jnp.log(jnp.clip(x_big * x_big, 1e-6, None))
    y_sq = jax.block_until_ready(square_mod(x_big))
    y_lg = jax.block_until_ready(log_mod(y_sq))
    assert jnp.allclose(y_sq, x_big * x_big, atol=1e-6, rtol=1e-6)
    assert jnp.allclose(y_lg, ref_big, atol=1e-6, rtol=1e-6)

    #    Fused square -> safe_log: 2 HBM passes instead of 4.
    fused_mod = fuse_expressions(square_mod, log_mod)
    y_fused = jax.block_until_ready(fused_mod(x_big))
    assert jnp.allclose(y_fused, ref_big, atol=1e-6, rtol=1e-6)

    # 3) Size not a multiple of 128: plain-JAX fallback (no pad/slice passes).
    x_odd = jax.random.normal(k3, (4, 7, 33, 65), dtype=jnp.float32)
    y_odd = jax.block_until_ready(square_mod(x_odd))
    assert jnp.allclose(y_odd, x_odd * x_odd, atol=1e-6, rtol=1e-6)

    # 4) Row count not a multiple of the block: exercises the masked tail block.
    x_tail = jax.random.normal(k4, (5, 1000, 128), dtype=jnp.float32)
    y_tail = jax.block_until_ready(square_mod(x_tail))
    assert jnp.allclose(y_tail, x_tail * x_tail, atol=1e-6, rtol=1e-6)

    # 5) Donated-input path: output aliases input buffer (no 2nd HBM alloc when
    #    the caller actually donates; correctness is preserved regardless).
    x_don = jax.random.normal(k5, (4, 32, 64, 128), dtype=jnp.float32)
    ref_don = x_don * x_don
    y_don = jax.block_until_ready(Expression(square, donate_input=True)(x_don))
    assert jnp.allclose(y_don, ref_don, atol=1e-6, rtol=1e-6)

    # 6) Shape-preserving but NON-elementwise expression: the jaxpr allowlist
    #    rejects it, so it takes the plain-JAX fallback and stays correct.
    demean_mod = Expression(lambda x: x - jnp.mean(x, axis=-1, keepdims=True))
    y_dm = jax.block_until_ready(demean_mod(x_big))
    assert jnp.allclose(y_dm, x_big - jnp.mean(x_big, axis=-1, keepdims=True),
                        atol=1e-5, rtol=1e-5)

    print("KERNEL_OK")
</pallas_src>

<mosaic_0001>
module attributes {stable_mosaic.version = 11 : i64} {
  func.func @kernel(%arg0: i32, %arg1: memref<512x1024xf32, #tpu.memory_space<vmem>>, %arg2: memref<512x1024xf32, #tpu.memory_space<vmem>>) attributes {dimension_semantics = [#tpu.dimension_semantics<parallel>], iteration_bounds = array<i64: 4>, scalar_prefetch = 0 : i64, scratch_operands = 0 : i64, tpu.core_type = #tpu.core_type<tc>, window_params = [{transform_indices = @transform_0, window_bounds = array<i64: 512, 1024>}, {transform_indices = @transform_1, window_bounds = array<i64: 512, 1024>}]} {
    %c0 = arith.constant 0 : index
    %c0_0 = arith.constant 0 : index
    %0 = vector.load %arg1[%c0, %c0_0] : memref<512x1024xf32, #tpu.memory_space<vmem>>, vector<512x1024xf32>
    %1 = arith.mulf %0, %0 : vector<512x1024xf32>
    %c0_1 = arith.constant 0 : index
    %c0_2 = arith.constant 0 : index
    %2 = vector.load %arg2[%c0_1, %c0_2] : memref<512x1024xf32, #tpu.memory_space<vmem>>, vector<512x1024xf32>
    tpu.vector_store %arg2[%c0_1, %c0_2], %1 {strides = array<i32>} : memref<512x1024xf32, #tpu.memory_space<vmem>>, vector<512x1024xf32>,
    return
  }
  func.func @transform_0(%arg0: i32) -> (i32, i32) {
    %c0_i32 = arith.constant 0 : i32
    %c0_i32_0 = arith.constant 0 : i32
    return %arg0, %c0_i32 : i32, i32
  }
  func.func @transform_1(%arg0: i32) -> (i32, i32) {
    %c0_i32 = arith.constant 0 : i32
    %c0_i32_0 = arith.constant 0 : i32
    return %arg0, %c0_i32 : i32, i32
  }
}

</mosaic_0001>

<llo_original>
// kernel: tpu_custom_call.1
$region0: #{tpu_custom_call.1}
  #allocation0 [shape = 'u32[]', space=smem, size = 0x4, offset = 0x4, fixed_abs, tag = 'smem constant byte address 0x4 - core index']
  #allocation1 [shape = 'u32[144,128]{1,0:T(1,128)}', space=vmem, size = 0x12000, scoped, tag = 'internal scratch']
  %s0 = inlined_call_operand.hbm [shape: f32[2048,1024], index: 0, kind: input, shape index: {}]
  %s1 = inlined_call_operand.hbm [shape: f32[2048,1024], index: 1, kind: output, shape index: {}]
  %s2 = sld [smem:[#allocation0]]
  $region41: #{tpu_custom_call.1} parent=0
    _
  %s4 = ssub.s32 1, %s2
  %s5 = scalar_select 0, %s4, %s2
  $region1: #{tpu_custom_call.1} parent=0
    #allocation2 [shape = 'u8[4194304]{0}', space=vmem, size = 0x400000, scoped, tag = 'input window, operand 0']
    #allocation3 [shape = 's32[2]{0}', space=sflag, size = 0x8, scoped, tag = 'scoped memory for tpu_custom_call.1']
    #allocation4 [shape = 's32[2]{0}', space=sflag, size = 0x8, scoped, tag = 'scoped memory for tpu_custom_call.1']
    #allocation5 [shape = 'u8[4194304]{0}', space=vmem, size = 0x400000, scoped, tag = 'output window, operand 0']
    %6 = vsyncpa [#allocation3], 0
    %s7 = scalar_lea.sflag [#allocation3], 1
    %8 = vsyncpa %s7, 0
    %9 = vsyncpa [#allocation4], 0
    %s10 = scalar_lea.sflag [#allocation4], 1
    %11 = vsyncpa %s10, 0
    loop: start=0, step=1, limit=6
    $region2: #{tpu_custom_call.1} parent=1 // loop_pre_header
      _
    $region3: #{tpu_custom_call.1} parent=1 // loop_header
      %s13 = sphi 0, %s17
      %p14 = scmp.ge.s32.totalorder %s13, 6
      %s23 = sphi 0, %s25
      %s26 = sphi 0, %s23
      %s27 = sphi 0, %s26
      %s43 = sphi 0, %s27
      %s49 = sphi 0, %s51
      %s52 = sphi 0, %s49
      %s53 = sphi 0, %s52
      %s69 = sphi 0, %s53
    $region4: #{tpu_custom_call.1} parent=1 // loop_header_branch
      %16 = sbr.rel (%p14) target = $region8
    $region5: #{tpu_custom_call.1} parent=1 // loop_body
      %s18 = ssub.s32 %s13, 1
      %s19 = ssub.s32 %s13, 2
      %s20 = sadd.s32 %s13, 1
      %s21 = ssub.s32 %s13, %s20
      %p22 = scmp.eq.s32.totalorder %s21, 0
      %s24 = sadd.s32 %s23, 1
      %s25 = scalar_select %p22, %s23, %s24
      %p28 = pneg %p22
      %p29 = scmp.eq.s32.totalorder %s13, 3
      %p30 = por %p28, %p29
      %p31 = scmp.ne.s32.totalorder %s23, %s26
      %p32 = scmp.eq.s32.totalorder %s13, 0
      %p33 = por %p31, %p32
      %p34 = scmp.ne.s32.totalorder %s23, %s26
      %p35 = scmp.eq.s32.totalorder %s18, 3
      %p36 = por %p34, %p35
      %p37 = scmp.ne.s32.totalorder %s26, %s27
      %p38 = scmp.eq.s32.totalorder %s18, 0
      %p39 = por %p37, %p38
      %p40 = scmp.ne.s32.totalorder %s26, %s27
      %p41 = scmp.eq.s32.totalorder %s19, 3
      %p42 = por %p40, %p41
      %p44 = scmp.ne.s32.totalorder %s27, %s43
      %p45 = scmp.eq.s32.totalorder %s19, 0
      %p46 = por %p44, %p45
      %s47 = ssub.s32 %s13, %s20
      %p48 = scmp.eq.s32.totalorder %s47, 0
      %s50 = sadd.s32 %s49, 1
      %s51 = scalar_select %p48, %s49, %s50
      %p54 = pneg %p48
      %p55 = scmp.eq.s32.totalorder %s13, 3
      %p56 = por %p54, %p55
      %p57 = scmp.ne.s32.totalorder %s49, %s52
      %p58 = scmp.eq.s32.totalorder %s13, 0
      %p59 = por %p57, %p58
      %p60 = scmp.ne.s32.totalorder %s49, %s52
      %p61 = scmp.eq.s32.totalorder %s18, 3
      %p62 = por %p60, %p61
      %p63 = scmp.ne.s32.totalorder %s52, %s53
      %p64 = scmp.eq.s32.totalorder %s18, 0
      %p65 = por %p63, %p64
      %p66 = scmp.ne.s32.totalorder %s52, %s53
      %p67 = scmp.eq.s32.totalorder %s19, 3
      %p68 = por %p66, %p67
      %p70 = scmp.ne.s32.totalorder %s53, %s69
      %p71 = scmp.eq.s32.totalorder %s19, 0
      %p72 = por %p70, %p71
      %p73 = scmp.le.s32.totalorder 1, %s13
      %p74 = scmp.lt.s32.totalorder %s13, 5
      %p75 = pnand %p73, %p74
      %p76 = pneg %p75
      // Predicated region
      $region9: #{tpu_custom_call.1} parent=5 // pred_check
        _
      $region10: #{tpu_custom_call.1} parent=5 // pred_check_branch
        %78 = sbr.rel (%p75) target = $region12
      $region11: #{tpu_custom_call.1} parent=5 // pred_region
        %s79 = ssub.s32 %s13, 1
      $region12: #{tpu_custom_call.1} parent=5 // pred_fallthru
        _
      %p80 = scmp.lt.s32.totalorder %s13, 4
      // Predicated region
      $region13: #{tpu_custom_call.1} parent=5 // pred_check
        %p81 = pneg %p80
      $region14: #{tpu_custom_call.1} parent=5 // pred_check_branch
        %83 = sbr.rel (%p81) target = $region16
      $region15: #{tpu_custom_call.1} parent=5 // pred_region
        // Predicated region
        $region17: #{tpu_custom_call.1} parent=15 // pred_check
          %p84 = pneg %p33
        $region18: #{tpu_custom_call.1} parent=15 // pred_check_branch
          %86 = sbr.rel (%p84) target = $region20
        $region19: #{tpu_custom_call.1} parent=15 // pred_region
          %s87 = sand.u32 %s23, 1
          %s88 = scalar_lea.sflag [#allocation3], %s87
          %s89 = sand.u32 %s23, 1
          %s90 = smul.addr %s89, 4096
          %s91 = scalar_lea.vmem [#allocation2], %s90
          %s92 = smul.u32 64, %s13
          %s94 = ssub.s32 65536, 65536
          %95 = vsyncadd %s88, %s94
          %s96 = smul.addr %s92, 8
          %s97 = smul.addr %s96, 128
          %s98 = scalar_lea.hbm %s0, %s97
          %s99 = sshll.u32 %s91, 4
          %s100 = int_to_ptr.vmem [resolvable:$true] %s99
          %105 = dma.hbm_to_vmem [thread:$0]  %s98, 65536, %s100, %s88, 1024, 1024, 64
        $region20: #{tpu_custom_call.1} parent=15 // pred_fallthru
          _
      $region16: #{tpu_custom_call.1} parent=5 // pred_fallthru
        _
      %p106 = scmp.le.s32.totalorder 1, %s13
      %p107 = scmp.lt.s32.totalorder %s13, 5
      %p108 = pnand %p106, %p107
      %p109 = pneg %p108
      // Predicated region
      $region21: #{tpu_custom_call.1} parent=5 // pred_check
        _
      $region22: #{tpu_custom_call.1} parent=5 // pred_check_branch
        %111 = sbr.rel (%p108) target = $region24
      $region23: #{tpu_custom_call.1} parent=5 // pred_region
        %s112 = ssub.s32 %s13, 1
        %s113 = sand.u32 %s26, 1
        %s114 = scalar_lea.sflag [#allocation3], %s113
        %s115 = sand.u32 %s26, 1
        %s116 = smul.addr %s115, 4096
        %s117 = scalar_lea.vmem [#allocation2], %s116
        // Predicated region
        $region25: #{tpu_custom_call.1} parent=23 // pred_check
          %p118 = pneg %p39
        $region26: #{tpu_custom_call.1} parent=23 // pred_check_branch
          %120 = sbr.rel (%p118) target = $region28
        $region27: #{tpu_custom_call.1} parent=23 // pred_region
          %121 = dma.done %s114, 65536
        $region28: #{tpu_custom_call.1} parent=23 // pred_fallthru
          _
        %s122 = sand.u32 %s26, 1
        %s123 = scalar_lea.sflag [#allocation3], %s122
        %s124 = sand.u32 %s26, 1
        %s125 = smul.addr %s124, 4096
        %s126 = scalar_lea.vmem [#allocation2], %s125
        %p127 = pneg %p39
        %p128 = pneg %p36
        %p129 = pneg %p65
        %p130 = pneg %p62
        %s131 = sand.u32 %s52, 1
        %s132 = scalar_lea.sflag [#allocation4], %s131
        %s133 = sand.u32 %s52, 1
        %s134 = smul.addr %s133, 4096
        %s135 = scalar_lea.vmem [#allocation5], %s134
        %s136 = smul.u32 64, %s18
        %s137 = smul.u32 64, %s18
        %v138 = vld [vmem:[%s117] sm:$0xff]
        %v139 = vld [vmem:[%s117 + $0x8] sm:$0xff]
        %v140 = vld [vmem:[%s117 + $0x10] sm:$0xff]
        %v141 = vld [vmem:[%s117 + $0x18] sm:$0xff]
        %v142 = vld [vmem:[%s117 + $0x20] sm:$0xff]
        %v143 = vld [vmem:[%s117 + $0x28] sm:$0xff]
        %v144 = vld [vmem:[%s117 + $0x30] sm:$0xff]
        %v145 = vld [vmem:[%s117 + $0x38] sm:$0xff]
        %v146 = vld [vmem:[%s117 + $0x40] sm:$0xff]
        %v147 = vld [vmem:[%s117 + $0x48] sm:$0xff]
        %v148 = vld [vmem:[%s117 + $0x50] sm:$0xff]
        %v149 = vld [vmem:[%s117 + $0x58] sm:$0xff]
        %v150 = vld [vmem:[%s117 + $0x60] sm:$0xff]
        %v151 = vld [vmem:[%s117 + $0x68] sm:$0xff]
        %v152 = vld [vmem:[%s117 + $0x70] sm:$0xff]
        %v153 = vld [vmem:[%s117 + $0x78] sm:$0xff]
        %v154 = vld [vmem:[%s117 + $0x80] sm:$0xff]
        %v155 = vld [vmem:[%s117 + $0x88] sm:$0xff]
        %v156 = vld [vmem:[%s117 + $0x90] sm:$0xff]
        %v157 = vld [vmem:[%s117 + $0x98] sm:$0xff]
        %v158 = vld [vmem:[%s117 + $0xa0] sm:$0xff]
        %v159 = vld [vmem:[%s117 + $0xa8] sm:$0xff]
        %v160 = vld [vmem:[%s117 + $0xb0] sm:$0xff]
        %v161 = vld [vmem:[%s117 + $0xb8] sm:$0xff]
        %v162 = vld [vmem:[%s117 + $0xc0] sm:$0xff]
        %v163 = vld [vmem:[%s117 + $0xc8] sm:$0xff]
        %v164 = vld [vmem:[%s117 + $0xd0] sm:$0xff]
        %v165 = vld [vmem:[%s117 + $0xd8] sm:$0xff]
        %v166 = vld [vmem:[%s117 + $0xe0] sm:$0xff]
        %v167 = vld [vmem:[%s117 + $0xe8] sm:$0xff]
        %v168 = vld [vmem:[%s117 + $0xf0] sm:$0xff]
        %v169 = vld [vmem:[%s117 + $0xf8] sm:$0xff]
        %v170 = vld [vmem:[%s117 + $0x100] sm:$0xff]
        %v171 = vld [vmem:[%s117 + $0x108] sm:$0xff]
        %v172 = vld [vmem:[%s117 + $0x110] sm:$0xff]
        %v173 = vld [vmem:[%s117 + $0x118] sm:$0xff]
        %v174 = vld [vmem:[%s117 + $0x120] sm:$0xff]
        %v175 = vld [vmem:[%s117 + $0x128] sm:$0xff]
        %v176 = vld [vmem:[%s117 + $0x130] sm:$0xff]
        %v177 = vld [vmem:[%s117 + $0x138] sm:$0xff]
        %v178 = vld [vmem:[%s117 + $0x140] sm:$0xff]
        %v179 = vld [vmem:[%s117 + $0x148] sm:$0xff]
        %v180 = vld [vmem:[%s117 + $0x150] sm:$0xff]
        %v181 = vld [vmem:[%s117 + $0x158] sm:$0xff]
        %v182 = vld [vmem:[%s117 + $0x160] sm:$0xff]
        %v183 = vld [vmem:[%s117 + $0x168] sm:$0xff]
        %v184 = vld [vmem:[%s117 + $0x170] sm:$0xff]
        %v185 = vld [vmem:[%s117 + $0x178] sm:$0xff]
        %v186 = vld [vmem:[%s117 + $0x180] sm:$0xff]
        %v187 = vld [vmem:[%s117 + $0x188] sm:$0xff]
        %v188 = vld [vmem:[%s117 + $0x190] sm:$0xff]
        %v189 = vld [vmem:[%s117 + $0x198] sm:$0xff]
        %v190 = vld [vmem:[%s117 + $0x1a0] sm:$0xff]
        %v191 = vld [vmem:[%s117 + $0x1a8] sm:$0xff]
        %v192 = vld [vmem:[%s117 + $0x1b0] sm:$0xff]
        %v193 = vld [vmem:[%s117 + $0x1b8] sm:$0xff]
        %v194 = vld [vmem:[%s117 + $0x1c0] sm:$0xff]
        %v195 = vld [vmem:[%s117 + $0x1c8] sm:$0xff]
        %v196 = vld [vmem:[%s117 + $0x1d0] sm:$0xff]
        %v197 = vld [vmem:[%s117 + $0x1d8] sm:$0xff]
        %v198 = vld [vmem:[%s117 + $0x1e0] sm:$0xff]
        %v199 = vld [vmem:[%s117 + $0x1e8] sm:$0xff]
        %v200 = vld [vmem:[%s117 + $0x1f0] sm:$0xff]
        %v201 = vld [vmem:[%s117 + $0x1f8] sm:$0xff]
        %v202 = vld [vmem:[%s117 + $0x200] sm:$0xff]
        %v203 = vld [vmem:[%s117 + $0x208] sm:$0xff]
        %v204 = vld [vmem:[%s117 + $0x210] sm:$0xff]
        %v205 = vld [vmem:[%s117 + $0x218] sm:$0xff]
        %v206 = vld [vmem:[%s117 + $0x220] sm:$0xff]
        %v207 = vld [vmem:[%s117 + $0x228] sm:$0xff]
        %v208 = vld [vmem:[%s117 + $0x230] sm:$0xff]
        %v209 = vld [vmem:[%s117 + $0x238] sm:$0xff]
        %v210 = vld [vmem:[%s117 + $0x240] sm:$0xff]
        %v211 = vld [vmem:[%s117 + $0x248] sm:$0xff]
        %v212 = vld [vmem:[%s117 + $0x250] sm:$0xff]
        %v213 = vld [vmem:[%s117 + $0x258] sm:$0xff]
        %v214 = vld [vmem:[%s117 + $0x260] sm:$0xff]
        %v215 = vld [vmem:[%s117 + $0x268] sm:$0xff]
        %v216 = vld [vmem:[%s117 + $0x270] sm:$0xff]
        %v217 = vld [vmem:[%s117 + $0x278] sm:$0xff]
        %v218 = vld [vmem:[%s117 + $0x280] sm:$0xff]
        %v219 = vld [vmem:[%s117 + $0x288] sm:$0xff]
        %v220 = vld [vmem:[%s117 + $0x290] sm:$0xff]
        %v221 = vld [vmem:[%s117 + $0x298] sm:$0xff]
        %v222 = vld [vmem:[%s117 + $0x2a0] sm:$0xff]
        %v223 = vld [vmem:[%s117 + $0x2a8] sm:$0xff]
        %v224 = vld [vmem:[%s117 + $0x2b0] sm:$0xff]
        %v225 = vld [vmem:[%s117 + $0x2b8] sm:$0xff]
        %v226 = vld [vmem:[%s117 + $0x2c0] sm:$0xff]
        %v227 = vld [vmem:[%s117 + $0x2c8] sm:$0xff]
        %v228 = vld [vmem:[%s117 + $0x2d0] sm:$0xff]
        %v229 = vld [vmem:[%s117 + $0x2d8] sm:$0xff]
        %v230 = vld [vmem:[%s117 + $0x2e0] sm:$0xff]
        %v231 = vld [vmem:[%s117 + $0x2e8] sm:$0xff]
        %v232 = vld [vmem:[%s117 + $0x2f0] sm:$0xff]
        %v233 = vld [vmem:[%s117 + $0x2f8] sm:$0xff]
        %v234 = vld [vmem:[%s117 + $0x300] sm:$0xff]
        %v235 = vld [vmem:[%s117 + $0x308] sm:$0xff]
        %v236 = vld [vmem:[%s117 + $0x310] sm:$0xff]
        %v237 = vld [vmem:[%s117 + $0x318] sm:$0xff]
        %v238 = vld [vmem:[%s117 + $0x320] sm:$0xff]
        %v239 = vld [vmem:[%s117 + $0x328] sm:$0xff]
        %v240 = vld [vmem:[%s117 + $0x330] sm:$0xff]
        %v241 = vld [vmem:[%s117 + $0x338] sm:$0xff]
        %v242 = vld [vmem:[%s117 + $0x340] sm:$0xff]
        %v243 = vld [vmem:[%s117 + $0x348] sm:$0xff]
        %v244 = vld [vmem:[%s117 + $0x350] sm:$0xff]
        %v245 = vld [vmem:[%s117 + $0x358] sm:$0xff]
        %v246 = vld [vmem:[%s117 + $0x360] sm:$0xff]
        %v247 = vld [vmem:[%s117 + $0x368] sm:$0xff]
        %v248 = vld [vmem:[%s117 + $0x370] sm:$0xff]
        %v249 = vld [vmem:[%s117 + $0x378] sm:$0xff]
        %v250 = vld [vmem:[%s117 + $0x380] sm:$0xff]
        %v251 = vld [vmem:[%s117 + $0x388] sm:$0xff]
        %v252 = vld [vmem:[%s117 + $0x390] sm:$0xff]
        %v253 = vld [vmem:[%s117 + $0x398] sm:$0xff]
        %v254 = vld [vmem:[%s117 + $0x3a0] sm:$0xff]
        %v255 = vld [vmem:[%s117 + $0x3a8] sm:$0xff]
        %v256 = vld [vmem:[%s117 + $0x3b0] sm:$0xff]
        %v257 = vld [vmem:[%s117 + $0x3b8] sm:$0xff]
        %v258 = vld [vmem:[%s117 + $0x3c0] sm:$0xff]
        %v259 = vld [vmem:[%s117 + $0x3c8] sm:$0xff]
        %v260 = vld [vmem:[%s117 + $0x3d0] sm:$0xff]
        %v261 = vld [vmem:[%s117 + $0x3d8] sm:$0xff]
        %v262 = vld [vmem:[%s117 + $0x3e0] sm:$0xff]
        %v263 = vld [vmem:[%s117 + $0x3e8] sm:$0xff]
        %v264 = vld [vmem:[%s117 + $0x3f0] sm:$0xff]
        %v265 = vld [vmem:[%s117 + $0x3f8] sm:$0xff]
        %v266 = vld [vmem:[%s117 + $0x400] sm:$0xff]
        %v267 = vld [vmem:[%s117 + $0x408] sm:$0xff]
        %v268 = vld [vmem:[%s117 + $0x410] sm:$0xff]
        %v269 = vld [vmem:[%s117 + $0x418] sm:$0xff]
        %v270 = vld [vmem:[%s117 + $0x420] sm:$0xff]
        %v271 = vld [vmem:[%s117 + $0x428] sm:$0xff]
        %v272 = vld [vmem:[%s117 + $0x430] sm:$0xff]
        %v273 = vld [vmem:[%s117 + $0x438] sm:$0xff]
        %v274 = vld [vmem:[%s117 + $0x440] sm:$0xff]
        %v275 = vld [vmem:[%s117 + $0x448] sm:$0xff]
        %v276 = vld [vmem:[%s117 + $0x450] sm:$0xff]
        %v277 = vld [vmem:[%s117 + $0x458] sm:$0xff]
        %v278 = vld [vmem:[%s117 + $0x460] sm:$0xff]
        %v279 = vld [vmem:[%s117 + $0x468] sm:$0xff]
        %v280 = vld [vmem:[%s117 + $0x470] sm:$0xff]
        %v281 = vld [vmem:[%s117 + $0x478] sm:$0xff]
        %v282 = vld [vmem:[%s117 + $0x480] sm:$0xff]
        %v283 = vld [vmem:[%s117 + $0x488] sm:$0xff]
        %v284 = vld [vmem:[%s117 + $0x490] sm:$0xff]
        %v285 = vld [vmem:[%s117 + $0x498] sm:$0xff]
        %v286 = vld [vmem:[%s117 + $0x4a0] sm:$0xff]
        %v287 = vld [vmem:[%s117 + $0x4a8] sm:$0xff]
        %v288 = vld [vmem:[%s117 + $0x4b0] sm:$0xff]
        %v289 = vld [vmem:[%s117 + $0x4b8] sm:$0xff]
        %v290 = vld [vmem:[%s117 + $0x4c0] sm:$0xff]
        %v291 = vld [vmem:[%s117 + $0x4c8] sm:$0xff]
        %v292 = vld [vmem:[%s117 + $0x4d0] sm:$0xff]
        %v293 = vld [vmem:[%s117 + $0x4d8] sm:$0xff]
        %v294 = vld [vmem:[%s117 + $0x4e0] sm:$0xff]
        %v295 = vld [vmem:[%s117 + $0x4e8] sm:$0xff]
        %v296 = vld [vmem:[%s117 + $0x4f0] sm:$0xff]
        %v297 = vld [vmem:[%s117 + $0x4f8] sm:$0xff]
        %v298 = vld [vmem:[%s117 + $0x500] sm:$0xff]
        %v299 = vld [vmem:[%s117 + $0x508] sm:$0xff]
        %v300 = vld [vmem:[%s117 + $0x510] sm:$0xff]
        %v301 = vld [vmem:[%s117 + $0x518] sm:$0xff]
        %v302 = vld [vmem:[%s117 + $0x520] sm:$0xff]
        %v303 = vld [vmem:[%s117 + $0x528] sm:$0xff]
        %v304 = vld [vmem:[%s117 + $0x530] sm:$0xff]
        %v305 = vld [vmem:[%s117 + $0x538] sm:$0xff]
        %v306 = vld [vmem:[%s117 + $0x540] sm:$0xff]
        %v307 = vld [vmem:[%s117 + $0x548] sm:$0xff]
        %v308 = vld [vmem:[%s117 + $0x550] sm:$0xff]
        %v309 = vld [vmem:[%s117 + $0x558] sm:$0xff]
        %v310 = vld [vmem:[%s117 + $0x560] sm:$0xff]
        %v311 = vld [vmem:[%s117 + $0x568] sm:$0xff]
        %v312 = vld [vmem:[%s117 + $0x570] sm:$0xff]
        %v313 = vld [vmem:[%s117 + $0x578] sm:$0xff]
        %v314 = vld [vmem:[%s117 + $0x580] sm:$0xff]
        %v315 = vld [vmem:[%s117 + $0x588] sm:$0xff]
        %v316 = vld [vmem:[%s117 + $0x590] sm:$0xff]
        %v317 = vld [vmem:[%s117 + $0x598] sm:$0xff]
        %v318 = vld [vmem:[%s117 + $0x5a0] sm:$0xff]
        %v319 = vld [vmem:[%s117 + $0x5a8] sm:$0xff]
        %v320 = vld [vmem:[%s117 + $0x5b0] sm:$0xff]
        %v321 = vld [vmem:[%s117 + $0x5b8] sm:$0xff]
        %v322 = vld [vmem:[%s117 + $0x5c0] sm:$0xff]
        %v323 = vld [vmem:[%s117 + $0x5c8] sm:$0xff]
        %v324 = vld [vmem:[%s117 + $0x5d0] sm:$0xff]
        %v325 = vld [vmem:[%s117 + $0x5d8] sm:$0xff]
        %v326 = vld [vmem:[%s117 + $0x5e0] sm:$0xff]
        %v327 = vld [vmem:[%s117 + $0x5e8] sm:$0xff]
        %v328 = vld [vmem:[%s117 + $0x5f0] sm:$0xff]
        %v329 = vld [vmem:[%s117 + $0x5f8] sm:$0xff]
        %v330 = vld [vmem:[%s117 + $0x600] sm:$0xff]
        %v331 = vld [vmem:[%s117 + $0x608] sm:$0xff]
        %v332 = vld [vmem:[%s117 + $0x610] sm:$0xff]
        %v333 = vld [vmem:[%s117 + $0x618] sm:$0xff]
        %v334 = vld [vmem:[%s117 + $0x620] sm:$0xff]
        %v335 = vld [vmem:[%s117 + $0x628] sm:$0xff]
        %v336 = vld [vmem:[%s117 + $0x630] sm:$0xff]
        %v337 = vld [vmem:[%s117 + $0x638] sm:$0xff]
        %v338 = vld [vmem:[%s117 + $0x640] sm:$0xff]
        %v339 = vld [vmem:[%s117 + $0x648] sm:$0xff]
        %v340 = vld [vmem:[%s117 + $0x650] sm:$0xff]
        %v341 = vld [vmem:[%s117 + $0x658] sm:$0xff]
        %v342 = vld [vmem:[%s117 + $0x660] sm:$0xff]
        %v343 = vld [vmem:[%s117 + $0x668] sm:$0xff]
        %v344 = vld [vmem:[%s117 + $0x670] sm:$0xff]
        %v345 = vld [vmem:[%s117 + $0x678] sm:$0xff]
        %v346 = vld [vmem:[%s117 + $0x680] sm:$0xff]
        %v347 = vld [vmem:[%s117 + $0x688] sm:$0xff]
        %v348 = vld [vmem:[%s117 + $0x690] sm:$0xff]
        %v349 = vld [vmem:[%s117 + $0x698] sm:$0xff]
        %v350 = vld [vmem:[%s117 + $0x6a0] sm:$0xff]
        %v351 = vld [vmem:[%s117 + $0x6a8] sm:$0xff]
        %v352 = vld [vmem:[%s117 + $0x6b0] sm:$0xff]
        %v353 = vld [vmem:[%s117 + $0x6b8] sm:$0xff]
        %v354 = vld [vmem:[%s117 + $0x6c0] sm:$0xff]
        %v355 = vld [vmem:[%s117 + $0x6c8] sm:$0xff]
        %v356 = vld [vmem:[%s117 + $0x6d0] sm:$0xff]
        %v357 = vld [vmem:[%s117 + $0x6d8] sm:$0xff]
        %v358 = vld [vmem:[%s117 + $0x6e0] sm:$0xff]
        %v359 = vld [vmem:[%s117 + $0x6e8] sm:$0xff]
        %v360 = vld [vmem:[%s117 + $0x6f0] sm:$0xff]
        %v361 = vld [vmem:[%s117 + $0x6f8] sm:$0xff]
        %v362 = vld [vmem:[%s117 + $0x700] sm:$0xff]
        %v363 = vld [vmem:[%s117 + $0x708] sm:$0xff]
        %v364 = vld [vmem:[%s117 + $0x710] sm:$0xff]
        %v365 = vld [vmem:[%s117 + $0x718] sm:$0xff]
        %v366 = vld [vmem:[%s117 + $0x720] sm:$0xff]
        %v367 = vld [vmem:[%s117 + $0x728] sm:$0xff]
        %v368 = vld [vmem:[%s117 + $0x730] sm:$0xff]
        %v369 = vld [vmem:[%s117 + $0x738] sm:$0xff]
        %v370 = vld [vmem:[%s117 + $0x740] sm:$0xff]
        %v371 = vld [vmem:[%s117 + $0x748] sm:$0xff]
        %v372 = vld [vmem:[%s117 + $0x750] sm:$0xff]
        %v373 = vld [vmem:[%s117 + $0x758] sm:$0xff]
        %v374 = vld [vmem:[%s117 + $0x760] sm:$0xff]
        %v375 = vld [vmem:[%s117 + $0x768] sm:$0xff]
        %v376 = vld [vmem:[%s117 + $0x770] sm:$0xff]
        %v377 = vld [vmem:[%s117 + $0x778] sm:$0xff]
        %v378 = vld [vmem:[%s117 + $0x780] sm:$0xff]
        %v379 = vld [vmem:[%s117 + $0x788] sm:$0xff]
        %v380 = vld [vmem:[%s117 + $0x790] sm:$0xff]
        %v381 = vld [vmem:[%s117 + $0x798] sm:$0xff]
        %v382 = vld [vmem:[%s117 + $0x7a0] sm:$0xff]
        %v383 = vld [vmem:[%s117 + $0x7a8] sm:$0xff]
        %v384 = vld [vmem:[%s117 + $0x7b0] sm:$0xff]
        %v385 = vld [vmem:[%s117 + $0x7b8] sm:$0xff]
        %v386 = vld [vmem:[%s117 + $0x7c0] sm:$0xff]
        %v387 = vld [vmem:[%s117 + $0x7c8] sm:$0xff]
        %v388 = vld [vmem:[%s117 + $0x7d0] sm:$0xff]
        %v389 = vld [vmem:[%s117 + $0x7d8] sm:$0xff]
        %v390 = vld [vmem:[%s117 + $0x7e0] sm:$0xff]
        %v391 = vld [vmem:[%s117 + $0x7e8] sm:$0xff]
        %v392 = vld [vmem:[%s117 + $0x7f0] sm:$0xff]
        %v393 = vld [vmem:[%s117 + $0x7f8] sm:$0xff]
        %v394 = vld [vmem:[%s117 + $0x800] sm:$0xff]
        %v395 = vld [vmem:[%s117 + $0x808] sm:$0xff]
        %v396 = vld [vmem:[%s117 + $0x810] sm:$0xff]
        %v397 = vld [vmem:[%s117 + $0x818] sm:$0xff]
        %v398 = vld [vmem:[%s117 + $0x820] sm:$0xff]
        %v399 = vld [vmem:[%s117 + $0x828] sm:$0xff]
        %v400 = vld [vmem:[%s117 + $0x830] sm:$0xff]
        %v401 = vld [vmem:[%s117 + $0x838] sm:$0xff]
        %v402 = vld [vmem:[%s117 + $0x840] sm:$0xff]
        %v403 = vld [vmem:[%s117 + $0x848] sm:$0xff]
        %v404 = vld [vmem:[%s117 + $0x850] sm:$0xff]
        %v405 = vld [vmem:[%s117 + $0x858] sm:$0xff]
        %v406 = vld [vmem:[%s117 + $0x860] sm:$0xff]
        %v407 = vld [vmem:[%s117 + $0x868] sm:$0xff]
        %v408 = vld [vmem:[%s117 + $0x870] sm:$0xff]
        %v409 = vld [vmem:[%s117 + $0x878] sm:$0xff]
        %v410 = vld [vmem:[%s117 + $0x880] sm:$0xff]
        %v411 = vld [vmem:[%s117 + $0x888] sm:$0xff]
        %v412 = vld [vmem:[%s117 + $0x890] sm:$0xff]
        %v413 = vld [vmem:[%s117 + $0x898] sm:$0xff]
        %v414 = vld [vmem:[%s117 + $0x8a0] sm:$0xff]
        %v415 = vld [vmem:[%s117 + $0x8a8] sm:$0xff]
        %v416 = vld [vmem:[%s117 + $0x8b0] sm:$0xff]
        %v417 = vld [vmem:[%s117 + $0x8b8] sm:$0xff]
        %v418 = vld [vmem:[%s117 + $0x8c0] sm:$0xff]
        %v419 = vld [vmem:[%s117 + $0x8c8] sm:$0xff]
        %v420 = vld [vmem:[%s117 + $0x8d0] sm:$0xff]
        %v421 = vld [vmem:[%s117 + $0x8d8] sm:$0xff]
        %v422 = vld [vmem:[%s117 + $0x8e0] sm:$0xff]
        %v423 = vld [vmem:[%s117 + $0x8e8] sm:$0xff]
        %v424 = vld [vmem:[%s117 + $0x8f0] sm:$0xff]
        %v425 = vld [vmem:[%s117 + $0x8f8] sm:$0xff]
        %v426 = vld [vmem:[%s117 + $0x900] sm:$0xff]
        %v427 = vld [vmem:[%s117 + $0x908] sm:$0xff]
        %v428 = vld [vmem:[%s117 + $0x910] sm:$0xff]
        %v429 = vld [vmem:[%s117 + $0x918] sm:$0xff]
        %v430 = vld [vmem:[%s117 + $0x920] sm:$0xff]
        %v431 = vld [vmem:[%s117 + $0x928] sm:$0xff]
        %v432 = vld [vmem:[%s117 + $0x930] sm:$0xff]
        %v433 = vld [vmem:[%s117 + $0x938] sm:$0xff]
        %v434 = vld [vmem:[%s117 + $0x940] sm:$0xff]
        %v435 = vld [vmem:[%s117 + $0x948] sm:$0xff]
        %v436 = vld [vmem:[%s117 + $0x950] sm:$0xff]
        %v437 = vld [vmem:[%s117 + $0x958] sm:$0xff]
        %v438 = vld [vmem:[%s117 + $0x960] sm:$0xff]
        %v439 = vld [vmem:[%s117 + $0x968] sm:$0xff]
        %v440 = vld [vmem:[%s117 + $0x970] sm:$0xff]
        %v441 = vld [vmem:[%s117 + $0x978] sm:$0xff]
        %v442 = vld [vmem:[%s117 + $0x980] sm:$0xff]
        %v443 = vld [vmem:[%s117 + $0x988] sm:$0xff]
        %v444 = vld [vmem:[%s117 + $0x990] sm:$0xff]
        %v445 = vld [vmem:[%s117 + $0x998] sm:$0xff]
        %v446 = vld [vmem:[%s117 + $0x9a0] sm:$0xff]
        %v447 = vld [vmem:[%s117 + $0x9a8] sm:$0xff]
        %v448 = vld [vmem:[%s117 + $0x9b0] sm:$0xff]
        %v449 = vld [vmem:[%s117 + $0x9b8] sm:$0xff]
        %v450 = vld [vmem:[%s117 + $0x9c0] sm:$0xff]
        %v451 = vld [vmem:[%s117 + $0x9c8] sm:$0xff]
        %v452 = vld [vmem:[%s117 + $0x9d0] sm:$0xff]
        %v453 = vld [vmem:[%s117 + $0x9d8] sm:$0xff]
        %v454 = vld [vmem:[%s117 + $0x9e0] sm:$0xff]
        %v455 = vld [vmem:[%s117 + $0x9e8] sm:$0xff]
        %v456 = vld [vmem:[%s117 + $0x9f0] sm:$0xff]
        %v457 = vld [vmem:[%s117 + $0x9f8] sm:$0xff]
        %v458 = vld [vmem:[%s117 + $0xa00] sm:$0xff]
        %v459 = vld [vmem:[%s117 + $0xa08] sm:$0xff]
        %v460 = vld [vmem:[%s117 + $0xa10] sm:$0xff]
        %v461 = vld [vmem:[%s117 + $0xa18] sm:$0xff]
        %v462 = vld [vmem:[%s117 + $0xa20] sm:$0xff]
        %v463 = vld [vmem:[%s117 + $0xa28] sm:$0xff]
        %v464 = vld [vmem:[%s117 + $0xa30] sm:$0xff]
        %v465 = vld [vmem:[%s117 + $0xa38] sm:$0xff]
        %v466 = vld [vmem:[%s117 + $0xa40] sm:$0xff]
        %v467 = vld [vmem:[%s117 + $0xa48] sm:$0xff]
        %v468 = vld [vmem:[%s117 + $0xa50] sm:$0xff]
        %v469 = vld [vmem:[%s117 + $0xa58] sm:$0xff]
        %v470 = vld [vmem:[%s117 + $0xa60] sm:$0xff]
        %v471 = vld [vmem:[%s117 + $0xa68] sm:$0xff]
        %v472 = vld [vmem:[%s117 + $0xa70] sm:$0xff]
        %v473 = vld [vmem:[%s117 + $0xa78] sm:$0xff]
        %v474 = vld [vmem:[%s117 + $0xa80] sm:$0xff]
        %v475 = vld [vmem:[%s117 + $0xa88] sm:$0xff]
        %v476 = vld [vmem:[%s117 + $0xa90] sm:$0xff]
        %v477 = vld [vmem:[%s117 + $0xa98] sm:$0xff]
        %v478 = vld [vmem:[%s117 + $0xaa0] sm:$0xff]
        %v479 = vld [vmem:[%s117 + $0xaa8] sm:$0xff]
        %v480 = vld [vmem:[%s117 + $0xab0] sm:$0xff]
        %v481 = vld [vmem:[%s117 + $0xab8] sm:$0xff]
        %v482 = vld [vmem:[%s117 + $0xac0] sm:$0xff]
        %v483 = vld [vmem:[%s117 + $0xac8] sm:$0xff]
        %v484 = vld [vmem:[%s117 + $0xad0] sm:$0xff]
        %v485 = vld [vmem:[%s117 + $0xad8] sm:$0xff]
        %v486 = vld [vmem:[%s117 + $0xae0] sm:$0xff]
        %v487 = vld [vmem:[%s117 + $0xae8] sm:$0xff]
        %v488 = vld [vmem:[%s117 + $0xaf0] sm:$0xff]
        %v489 = vld [vmem:[%s117 + $0xaf8] sm:$0xff]
        %v490 = vld [vmem:[%s117 + $0xb00] sm:$0xff]
        %v491 = vld [vmem:[%s117 + $0xb08] sm:$0xff]
        %v492 = vld [vmem:[%s117 + $0xb10] sm:$0xff]
        %v493 = vld [vmem:[%s117 + $0xb18] sm:$0xff]
        %v494 = vld [vmem:[%s117 + $0xb20] sm:$0xff]
        %v495 = vld [vmem:[%s117 + $0xb28] sm:$0xff]
        %v496 = vld [vmem:[%s117 + $0xb30] sm:$0xff]
        %v497 = vld [vmem:[%s117 + $0xb38] sm:$0xff]
        %v498 = vld [vmem:[%s117 + $0xb40] sm:$0xff]
        %v499 = vld [vmem:[%s117 + $0xb48] sm:$0xff]
        %v500 = vld [vmem:[%s117 + $0xb50] sm:$0xff]
        %v501 = vld [vmem:[%s117 + $0xb58] sm:$0xff]
        %v502 = vld [vmem:[%s117 + $0xb60] sm:$0xff]
        %v503 = vld [vmem:[%s117 + $0xb68] sm:$0xff]
        %v504 = vld [vmem:[%s117 + $0xb70] sm:$0xff]
        %v505 = vld [vmem:[%s117 + $0xb78] sm:$0xff]
        %v506 = vld [vmem:[%s117 + $0xb80] sm:$0xff]
        %v507 = vld [vmem:[%s117 + $0xb88] sm:$0xff]
        %v508 = vld [vmem:[%s117 + $0xb90] sm:$0xff]
        %v509 = vld [vmem:[%s117 + $0xb98] sm:$0xff]
        %v510 = vld [vmem:[%s117 + $0xba0] sm:$0xff]
        %v511 = vld [vmem:[%s117 + $0xba8] sm:$0xff]
        %v512 = vld [vmem:[%s117 + $0xbb0] sm:$0xff]
        %v513 = vld [vmem:[%s117 + $0xbb8] sm:$0xff]
        %v514 = vld [vmem:[%s117 + $0xbc0] sm:$0xff]
        %v515 = vld [vmem:[%s117 + $0xbc8] sm:$0xff]
        %v516 = vld [vmem:[%s117 + $0xbd0] sm:$0xff]
        %v517 = vld [vmem:[%s117 + $0xbd8] sm:$0xff]
        %v518 = vld [vmem:[%s117 + $0xbe0] sm:$0xff]
        %v519 = vld [vmem:[%s117 + $0xbe8] sm:$0xff]
        %v520 = vld [vmem:[%s117 + $0xbf0] sm:$0xff]
        %v521 = vld [vmem:[%s117 + $0xbf8] sm:$0xff]
        %v522 = vld [vmem:[%s117 + $0xc00] sm:$0xff]
        %v523 = vld [vmem:[%s117 + $0xc08] sm:$0xff]
        %v524 = vld [vmem:[%s117 + $0xc10] sm:$0xff]
        %v525 = vld [vmem:[%s117 + $0xc18] sm:$0xff]
        %v526 = vld [vmem:[%s117 + $0xc20] sm:$0xff]
        %v527 = vld [vmem:[%s117 + $0xc28] sm:$0xff]
        %v528 = vld [vmem:[%s117 + $0xc30] sm:$0xff]
        %v529 = vld [vmem:[%s117 + $0xc38] sm:$0xff]
        %v530 = vld [vmem:[%s117 + $0xc40] sm:$0xff]
        %v531 = vld [vmem:[%s117 + $0xc48] sm:$0xff]
        %v532 = vld [vmem:[%s117 + $0xc50] sm:$0xff]
        %v533 = vld [vmem:[%s117 + $0xc58] sm:$0xff]
        %v534 = vld [vmem:[%s117 + $0xc60] sm:$0xff]
        %v535 = vld [vmem:[%s117 + $0xc68] sm:$0xff]
        %v536 = vld [vmem:[%s117 + $0xc70] sm:$0xff]
        %v537 = vld [vmem:[%s117 + $0xc78] sm:$0xff]
        %v538 = vld [vmem:[%s117 + $0xc80] sm:$0xff]
        %v539 = vld [vmem:[%s117 + $0xc88] sm:$0xff]
        %v540 = vld [vmem:[%s117 + $0xc90] sm:$0xff]
        %v541 = vld [vmem:[%s117 + $0xc98] sm:$0xff]
        %v542 = vld [vmem:[%s117 + $0xca0] sm:$0xff]
        %v543 = vld [vmem:[%s117 + $0xca8] sm:$0xff]
        %v544 = vld [vmem:[%s117 + $0xcb0] sm:$0xff]
        %v545 = vld [vmem:[%s117 + $0xcb8] sm:$0xff]
        %v546 = vld [vmem:[%s117 + $0xcc0] sm:$0xff]
        %v547 = vld [vmem:[%s117 + $0xcc8] sm:$0xff]
        %v548 = vld [vmem:[%s117 + $0xcd0] sm:$0xff]
        %v549 = vld [vmem:[%s117 + $0xcd8] sm:$0xff]
        %v550 = vld [vmem:[%s117 + $0xce0] sm:$0xff]
        %v551 = vld [vmem:[%s117 + $0xce8] sm:$0xff]
        %v552 = vld [vmem:[%s117 + $0xcf0] sm:$0xff]
        %v553 = vld [vmem:[%s117 + $0xcf8] sm:$0xff]
        %v554 = vld [vmem:[%s117 + $0xd00] sm:$0xff]
        %v555 = vld [vmem:[%s117 + $0xd08] sm:$0xff]
        %v556 = vld [vmem:[%s117 + $0xd10] sm:$0xff]
        %v557 = vld [vmem:[%s117 + $0xd18] sm:$0xff]
        %v558 = vld [vmem:[%s117 + $0xd20] sm:$0xff]
        %v559 = vld [vmem:[%s117 + $0xd28] sm:$0xff]
        %v560 = vld [vmem:[%s117 + $0xd30] sm:$0xff]
        %v561 = vld [vmem:[%s117 + $0xd38] sm:$0xff]
        %v562 = vld [vmem:[%s117 + $0xd40] sm:$0xff]
        %v563 = vld [vmem:[%s117 + $0xd48] sm:$0xff]
        %v564 = vld [vmem:[%s117 + $0xd50] sm:$0xff]
        %v565 = vld [vmem:[%s117 + $0xd58] sm:$0xff]
        %v566 = vld [vmem:[%s117 + $0xd60] sm:$0xff]
        %v567 = vld [vmem:[%s117 + $0xd68] sm:$0xff]
        %v568 = vld [vmem:[%s117 + $0xd70] sm:$0xff]
        %v569 = vld [vmem:[%s117 + $0xd78] sm:$0xff]
        %v570 = vld [vmem:[%s117 + $0xd80] sm:$0xff]
        %v571 = vld [vmem:[%s117 + $0xd88] sm:$0xff]
        %v572 = vld [vmem:[%s117 + $0xd90] sm:$0xff]
        %v573 = vld [vmem:[%s117 + $0xd98] sm:$0xff]
        %v574 = vld [vmem:[%s117 + $0xda0] sm:$0xff]
        %v575 = vld [vmem:[%s117 + $0xda8] sm:$0xff]
        %v576 = vld [vmem:[%s117 + $0xdb0] sm:$0xff]
        %v577 = vld [vmem:[%s117 + $0xdb8] sm:$0xff]
        %v578 = vld [vmem:[%s117 + $0xdc0] sm:$0xff]
        %v579 = vld [vmem:[%s117 + $0xdc8] sm:$0xff]
        %v580 = vld [vmem:[%s117 + $0xdd0] sm:$0xff]
        %v581 = vld [vmem:[%s117 + $0xdd8] sm:$0xff]
        %v582 = vld [vmem:[%s117 + $0xde0] sm:$0xff]
        %v583 = vld [vmem:[%s117 + $0xde8] sm:$0xff]
        %v584 = vld [vmem:[%s117 + $0xdf0] sm:$0xff]
        %v585 = vld [vmem:[%s117 + $0xdf8] sm:$0xff]
        %v586 = vld [vmem:[%s117 + $0xe00] sm:$0xff]
        %v587 = vld [vmem:[%s117 + $0xe08] sm:$0xff]
        %v588 = vld [vmem:[%s117 + $0xe10] sm:$0xff]
        %v589 = vld [vmem:[%s117 + $0xe18] sm:$0xff]
        %v590 = vld [vmem:[%s117 + $0xe20] sm:$0xff]
        %v591 = vld [vmem:[%s117 + $0xe28] sm:$0xff]
        %v592 = vld [vmem:[%s117 + $0xe30] sm:$0xff]
        %v593 = vld [vmem:[%s117 + $0xe38] sm:$0xff]
        %v594 = vld [vmem:[%s117 + $0xe40] sm:$0xff]
        %v595 = vld [vmem:[%s117 + $0xe48] sm:$0xff]
        %v596 = vld [vmem:[%s117 + $0xe50] sm:$0xff]
        %v597 = vld [vmem:[%s117 + $0xe58] sm:$0xff]
        %v598 = vld [vmem:[%s117 + $0xe60] sm:$0xff]
        %v599 = vld [vmem:[%s117 + $0xe68] sm:$0xff]
        %v600 = vld [vmem:[%s117 + $0xe70] sm:$0xff]
        %v601 = vld [vmem:[%s117 + $0xe78] sm:$0xff]
        %v602 = vld [vmem:[%s117 + $0xe80] sm:$0xff]
        %v603 = vld [vmem:[%s117 + $0xe88] sm:$0xff]
        %v604 = vld [vmem:[%s117 + $0xe90] sm:$0xff]
        %v605 = vld [vmem:[%s117 + $0xe98] sm:$0xff]
        %v606 = vld [vmem:[%s117 + $0xea0] sm:$0xff]
        %v607 = vld [vmem:[%s117 + $0xea8] sm:$0xff]
        %v608 = vld [vmem:[%s117 + $0xeb0] sm:$0xff]
        %v609 = vld [vmem:[%s117 + $0xeb8] sm:$0xff]
        %v610 = vld [vmem:[%s117 + $0xec0] sm:$0xff]
        %v611 = vld [vmem:[%s117 + $0xec8] sm:$0xff]
        %v612 = vld [vmem:[%s117 + $0xed0] sm:$0xff]
        %v613 = vld [vmem:[%s117 + $0xed8] sm:$0xff]
        %v614 = vld [vmem:[%s117 + $0xee0] sm:$0xff]
        %v615 = vld [vmem:[%s117 + $0xee8] sm:$0xff]
        %v616 = vld [vmem:[%s117 + $0xef0] sm:$0xff]
        %v617 = vld [vmem:[%s117 + $0xef8] sm:$0xff]
        %v618 = vld [vmem:[%s117 + $0xf00] sm:$0xff]
        %v619 = vld [vmem:[%s117 + $0xf08] sm:$0xff]
        %v620 = vld [vmem:[%s117 + $0xf10] sm:$0xff]
        %v621 = vld [vmem:[%s117 + $0xf18] sm:$0xff]
        %v622 = vld [vmem:[%s117 + $0xf20] sm:$0xff]
        %v623 = vld [vmem:[%s117 + $0xf28] sm:$0xff]
        %v624 = vld [vmem:[%s117 + $0xf30] sm:$0xff]
        %v625 = vld [vmem:[%s117 + $0xf38] sm:$0xff]
        %v626 = vld [vmem:[%s117 + $0xf40] sm:$0xff]
        %v627 = vld [vmem:[%s117 + $0xf48] sm:$0xff]
        %v628 = vld [vmem:[%s117 + $0xf50] sm:$0xff]
        %v629 = vld [vmem:[%s117 + $0xf58] sm:$0xff]
        %v630 = vld [vmem:[%s117 + $0xf60] sm:$0xff]
        %v631 = vld [vmem:[%s117 + $0xf68] sm:$0xff]
        %v632 = vld [vmem:[%s117 + $0xf70] sm:$0xff]
        %v633 = vld [vmem:[%s117 + $0xf78] sm:$0xff]
        %v634 = vld [vmem:[%s117 + $0xf80] sm:$0xff]
        %v635 = vld [vmem:[%s117 + $0xf88] sm:$0xff]
        %v636 = vld [vmem:[%s117 + $0xf90] sm:$0xff]
        %v637 = vld [vmem:[%s117 + $0xf98] sm:$0xff]
        %v638 = vld [vmem:[%s117 + $0xfa0] sm:$0xff]
        %v639 = vld [vmem:[%s117 + $0xfa8] sm:$0xff]
        %v640 = vld [vmem:[%s117 + $0xfb0] sm:$0xff]
        %v641 = vld [vmem:[%s117 + $0xfb8] sm:$0xff]
        %v642 = vld [vmem:[%s117 + $0xfc0] sm:$0xff]
        %v643 = vld [vmem:[%s117 + $0xfc8] sm:$0xff]
        %v644 = vld [vmem:[%s117 + $0xfd0] sm:$0xff]
        %v645 = vld [vmem:[%s117 + $0xfd8] sm:$0xff]
        %v646 = vld [vmem:[%s117 + $0xfe0] sm:$0xff]
        %v647 = vld [vmem:[%s117 + $0xfe8] sm:$0xff]
        %v648 = vld [vmem:[%s117 + $0xff0] sm:$0xff]
        %v649 = vld [vmem:[%s117 + $0xff8] sm:$0xff]
        %v650 = vmul.f32 %v138, %v138
        %v651 = vmul.f32 %v139, %v139
        %v652 = vmul.f32 %v140, %v140
        %v653 = vmul.f32 %v141, %v141
        %v654 = vmul.f32 %v142, %v142
        %v655 = vmul.f32 %v143, %v143
        %v656 = vmul.f32 %v144, %v144
        %v657 = vmul.f32 %v145, %v145
        %v658 = vmul.f32 %v146, %v146
        %v659 = vmul.f32 %v147, %v147
        %v660 = vmul.f32 %v148, %v148
        %v661 = vmul.f32 %v149, %v149
        %v662 = vmul.f32 %v150, %v150
        %v663 = vmul.f32 %v151, %v151
        %v664 = vmul.f32 %v152, %v152
        %v665 = vmul.f32 %v153, %v153
        %v666 = vmul.f32 %v154, %v154
        %v667 = vmul.f32 %v155, %v155
        %v668 = vmul.f32 %v156, %v156
        %v669 = vmul.f32 %v157, %v157
        %v670 = vmul.f32 %v158, %v158
        %v671 = vmul.f32 %v159, %v159
        %v672 = vmul.f32 %v160, %v160
        %v673 = vmul.f32 %v161, %v161
        %v674 = vmul.f32 %v162, %v162
        %v675 = vmul.f32 %v163, %v163
        %v676 = vmul.f32 %v164, %v164
        %v677 = vmul.f32 %v165, %v165
        %v678 = vmul.f32 %v166, %v166
        %v679 = vmul.f32 %v167, %v167
        %v680 = vmul.f32 %v168, %v168
        %v681 = vmul.f32 %v169, %v169
        %v682 = vmul.f32 %v170, %v170
        %v683 = vmul.f32 %v171, %v171
        %v684 = vmul.f32 %v172, %v172
        %v685 = vmul.f32 %v173, %v173
        %v686 = vmul.f32 %v174, %v174
        %v687 = vmul.f32 %v175, %v175
        %v688 = vmul.f32 %v176, %v176
        %v689 = vmul.f32 %v177, %v177
        %v690 = vmul.f32 %v178, %v178
        %v691 = vmul.f32 %v179, %v179
        %v692 = vmul.f32 %v180, %v180
        %v693 = vmul.f32 %v181, %v181
        %v694 = vmul.f32 %v182, %v182
        %v695 = vmul.f32 %v183, %v183
        %v696 = vmul.f32 %v184, %v184
        %v697 = vmul.f32 %v185, %v185
        %v698 = vmul.f32 %v186, %v186
        %v699 = vmul.f32 %v187, %v187
        %v700 = vmul.f32 %v188, %v188
        %v701 = vmul.f32 %v189, %v189
        %v702 = vmul.f32 %v190, %v190
        %v703 = vmul.f32 %v191, %v191
        %v704 = vmul.f32 %v192, %v192
        %v705 = vmul.f32 %v193, %v193
        %v706 = vmul.f32 %v194, %v194
        %v707 = vmul.f32 %v195, %v195
        %v708 = vmul.f32 %v196, %v196
        %v709 = vmul.f32 %v197, %v197
        %v710 = vmul.f32 %v198, %v198
        %v711 = vmul.f32 %v199, %v199
        %v712 = vmul.f32 %v200, %v200
        %v713 = vmul.f32 %v201, %v201
        %v714 = vmul.f32 %v202, %v202
        %v715 = vmul.f32 %v203, %v203
        %v716 = vmul.f32 %v204, %v204
        %v717 = vmul.f32 %v205, %v205
        %v718 = vmul.f32 %v206, %v206
        %v719 = vmul.f32 %v207, %v207
        %v720 = vmul.f32 %v208, %v208
        %v721 = vmul.f32 %v209, %v209
        %v722 = vmul.f32 %v210, %v210
        %v723 = vmul.f32 %v211, %v211
        %v724 = vmul.f32 %v212, %v212
        %v725 = vmul.f32 %v213, %v213
        %v726 = vmul.f32 %v214, %v214
        %v727 = vmul.f32 %v215, %v215
        %v728 = vmul.f32 %v216, %v216
        %v729 = vmul.f32 %v217, %v217
        %v730 = vmul.f32 %v218, %v218
        %v731 = vmul.f32 %v219, %v219
        %v732 = vmul.f32 %v220, %v220
        %v733 = vmul.f32 %v221, %v221
        %v734 = vmul.f32 %v222, %v222
        %v735 = vmul.f32 %v223, %v223
        %v736 = vmul.f32 %v224, %v224
        %v737 = vmul.f32 %v225, %v225
        %v738 = vmul.f32 %v226, %v226
        %v739 = vmul.f32 %v227, %v227
        %v740 = vmul.f32 %v228, %v228
        %v741 = vmul.f32 %v229, %v229
        %v742 = vmul.f32 %v230, %v230
        %v743 = vmul.f32 %v231, %v231
        %v744 = vmul.f32 %v232, %v232
        %v745 = vmul.f32 %v233, %v233
        %v746 = vmul.f32 %v234, %v234
        %v747 = vmul.f32 %v235, %v235
        %v748 = vmul.f32 %v236, %v236
        %v749 = vmul.f32 %v237, %v237
        %v750 = vmul.f32 %v238, %v238
        %v751 = vmul.f32 %v239, %v239
        %v752 = vmul.f32 %v240, %v240
        %v753 = vmul.f32 %v241, %v241
        %v754 = vmul.f32 %v242, %v242
        %v755 = vmul.f32 %v243, %v243
        %v756 = vmul.f32 %v244, %v244
        %v757 = vmul.f32 %v245, %v245
        %v758 = vmul.f32 %v246, %v246
        %v759 = vmul.f32 %v247, %v247
        %v760 = vmul.f32 %v248, %v248
        %v761 = vmul.f32 %v249, %v249
        %v762 = vmul.f32 %v250, %v250
        %v763 = vmul.f32 %v251, %v251
        %v764 = vmul.f32 %v252, %v252
        %v765 = vmul.f32 %v253, %v253
        %v766 = vmul.f32 %v254, %v254
        %v767 = vmul.f32 %v255, %v255
        %v768 = vmul.f32 %v256, %v256
        %v769 = vmul.f32 %v257, %v257
        %v770 = vmul.f32 %v258, %v258
        %v771 = vmul.f32 %v259, %v259
        %v772 = vmul.f32 %v260, %v260
        %v773 = vmul.f32 %v261, %v261
        %v774 = vmul.f32 %v262, %v262
        %v775 = vmul.f32 %v263, %v263
        %v776 = vmul.f32 %v264, %v264
        %v777 = vmul.f32 %v265, %v265
        %v778 = vmul.f32 %v266, %v266
        %v779 = vmul.f32 %v267, %v267
        %v780 = vmul.f32 %v268, %v268
        %v781 = vmul.f32 %v269, %v269
        %v782 = vmul.f32 %v270, %v270
        %v783 = vmul.f32 %v271, %v271
        %v784 = vmul.f32 %v272, %v272
        %v785 = vmul.f32 %v273, %v273
        %v786 = vmul.f32 %v274, %v274
        %v787 = vmul.f32 %v275, %v275
        %v788 = vmul.f32 %v276, %v276
        %v789 = vmul.f32 %v277, %v277
        %v790 = vmul.f32 %v278, %v278
        %v791 = vmul.f32 %v279, %v279
        %v792 = vmul.f32 %v280, %v280
        %v793 = vmul.f32 %v281, %v281
        %v794 = vmul.f32 %v282, %v282
        %v795 = vmul.f32 %v283, %v283
        %v796 = vmul.f32 %v284, %v284
        %v797 = vmul.f32 %v285, %v285
        %v798 = vmul.f32 %v286, %v286
        %v799 = vmul.f32 %v287, %v287
        %v800 = vmul.f32 %v288, %v288
        %v801 = vmul.f32 %v289, %v289
        %v802 = vmul.f32 %v290, %v290
        %v803 = vmul.f32 %v291, %v291
        %v804 = vmul.f32 %v292, %v292
        %v805 = vmul.f32 %v293, %v293
        %v806 = vmul.f32 %v294, %v294
        %v807 = vmul.f32 %v295, %v295
        %v808 = vmul.f32 %v296, %v296
        %v809 = vmul.f32 %v297, %v297
        %v810 = vmul.f32 %v298, %v298
        %v811 = vmul.f32 %v299, %v299
        %v812 = vmul.f32 %v300, %v300
        %v813 = vmul.f32 %v301, %v301
        %v814 = vmul.f32 %v302, %v302
        %v815 = vmul.f32 %v303, %v303
        %v816 = vmul.f32 %v304, %v304
        %v817 = vmul.f32 %v305, %v305
        %v818 = vmul.f32 %v306, %v306
        %v819 = vmul.f32 %v307, %v307
        %v820 = vmul.f32 %v308, %v308
        %v821 = vmul.f32 %v309, %v309
        %v822 = vmul.f32 %v310, %v310
        %v823 = vmul.f32 %v311, %v311
        %v824 = vmul.f32 %v312, %v312
        %v825 = vmul.f32 %v313, %v313
        %v826 = vmul.f32 %v314, %v314
        %v827 = vmul.f32 %v315, %v315
        %v828 = vmul.f32 %v316, %v316
        %v829 = vmul.f32 %v317, %v317
        %v830 = vmul.f32 %v318, %v318
        %v831 = vmul.f32 %v319, %v319
        %v832 = vmul.f32 %v320, %v320
        %v833 = vmul.f32 %v321, %v321
        %v834 = vmul.f32 %v322, %v322
        %v835 = vmul.f32 %v323, %v323
        %v836 = vmul.f32 %v324, %v324
        %v837 = vmul.f32 %v325, %v325
        %v838 = vmul.f32 %v326, %v326
        %v839 = vmul.f32 %v327, %v327
        %v840 = vmul.f32 %v328, %v328
        %v841 = vmul.f32 %v329, %v329
        %v842 = vmul.f32 %v330, %v330
        %v843 = vmul.f32 %v331, %v331
        %v844 = vmul.f32 %v332, %v332
        %v845 = vmul.f32 %v333, %v333
        %v846 = vmul.f32 %v334, %v334
        %v847 = vmul.f32 %v335, %v335
        %v848 = vmul.f32 %v336, %v336
        %v849 = vmul.f32 %v337, %v337
        %v850 = vmul.f32 %v338, %v338
        %v851 = vmul.f32 %v339, %v339
        %v852 = vmul.f32 %v340, %v340
        %v853 = vmul.f32 %v341, %v341
        %v854 = vmul.f32 %v342, %v342
        %v855 = vmul.f32 %v343, %v343
        %v856 = vmul.f32 %v344, %v344
        %v857 = vmul.f32 %v345, %v345
        %v858 = vmul.f32 %v346, %v346
        %v859 = vmul.f32 %v347, %v347
        %v860 = vmul.f32 %v348, %v348
        %v861 = vmul.f32 %v349, %v349
        %v862 = vmul.f32 %v350, %v350
        %v863 = vmul.f32 %v351, %v351
        %v864 = vmul.f32 %v352, %v352
        %v865 = vmul.f32 %v353, %v353
        %v866 = vmul.f32 %v354, %v354
        %v867 = vmul.f32 %v355, %v355
        %v868 = vmul.f32 %v356, %v356
        %v869 = vmul.f32 %v357, %v357
        %v870 = vmul.f32 %v358, %v358
        %v871 = vmul.f32 %v359, %v359
        %v872 = vmul.f32 %v360, %v360
        %v873 = vmul.f32 %v361, %v361
        %v874 = vmul.f32 %v362, %v362
        %v875 = vmul.f32 %v363, %v363
        %v876 = vmul.f32 %v364, %v364
        %v877 = vmul.f32 %v365, %v365
        %v878 = vmul.f32 %v366, %v366
        %v879 = vmul.f32 %v367, %v367
        %v880 = vmul.f32 %v368, %v368
        %v881 = vmul.f32 %v369, %v369
        %v882 = vmul.f32 %v370, %v370
        %v883 = vmul.f32 %v371, %v371
        %v884 = vmul.f32 %v372, %v372
        %v885 = vmul.f32 %v373, %v373
        %v886 = vmul.f32 %v374, %v374
        %v887 = vmul.f32 %v375, %v375
        %v888 = vmul.f32 %v376, %v376
        %v889 = vmul.f32 %v377, %v377
        %v890 = vmul.f32 %v378, %v378
        %v891 = vmul.f32 %v379, %v379
        %v892 = vmul.f32 %v380, %v380
        %v893 = vmul.f32 %v381, %v381
        %v894 = vmul.f32 %v382, %v382
        %v895 = vmul.f32 %v383, %v383
        %v896 = vmul.f32 %v384, %v384
        %v897 = vmul.f32 %v385, %v385
        %v898 = vmul.f32 %v386, %v386
        %v899 = vmul.f32 %v387, %v387
        %v900 = vmul.f32 %v388, %v388
        %v901 = vmul.f32 %v389, %v389
        %v902 = vmul.f32 %v390, %v390
        %v903 = vmul.f32 %v391, %v391
        %v904 = vmul.f32 %v392, %v392
        %v905 = vmul.f32 %v393, %v393
        %v906 = vmul.f32 %v394, %v394
        %v907 = vmul.f32 %v395, %v395
        %v908 = vmul.f32 %v396, %v396
        %v909 = vmul.f32 %v397, %v397
        %v910 = vmul.f32 %v398, %v398
        %v911 = vmul.f32 %v399, %v399
        %v912 = vmul.f32 %v400, %v400
        %v913 = vmul.f32 %v401, %v401
        %v914 = vmul.f32 %v402, %v402
        %v915 = vmul.f32 %v403, %v403
        %v916 = vmul.f32 %v404, %v404
        %v917 = vmul.f32 %v405, %v405
        %v918 = vmul.f32 %v406, %v406
        %v919 = vmul.f32 %v407, %v407
        %v920 = vmul.f32 %v408, %v408
        %v921 = vmul.f32 %v409, %v409
        %v922 = vmul.f32 %v410, %v410
        %v923 = vmul.f32 %v411, %v411
        %v924 = vmul.f32 %v412, %v412
        %v925 = vmul.f32 %v413, %v413
        %v926 = vmul.f32 %v414, %v414
        %v927 = vmul.f32 %v415, %v415
        %v928 = vmul.f32 %v416, %v416
        %v929 = vmul.f32 %v417, %v417
        %v930 = vmul.f32 %v418, %v418
        %v931 = vmul.f32 %v419, %v419
        %v932 = vmul.f32 %v420, %v420
        %v933 = vmul.f32 %v421, %v421
        %v934 = vmul.f32 %v422, %v422
        %v935 = vmul.f32 %v423, %v423
        %v936 = vmul.f32 %v424, %v424
        %v937 = vmul.f32 %v425, %v425
        %v938 = vmul.f32 %v426, %v426
        %v939 = vmul.f32 %v427, %v427
        %v940 = vmul.f32 %v428, %v428
        %v941 = vmul.f32 %v429, %v429
        %v942 = vmul.f32 %v430, %v430
        %v943 = vmul.f32 %v431, %v431
        %v944 = vmul.f32 %v432, %v432
        %v945 = vmul.f32 %v433, %v433
        %v946 = vmul.f32 %v434, %v434
        %v947 = vmul.f32 %v435, %v435
        %v948 = vmul.f32 %v436, %v436
        %v949 = vmul.f32 %v437, %v437
        %v950 = vmul.f32 %v438, %v438
        %v951 = vmul.f32 %v439, %v439
        %v952 = vmul.f32 %v440, %v440
        %v953 = vmul.f32 %v441, %v441
        %v954 = vmul.f32 %v442, %v442
        %v955 = vmul.f32 %v443, %v443
        %v956 = vmul.f32 %v444, %v444
        %v957 = vmul.f32 %v445, %v445
        %v958 = vmul.f32 %v446, %v446
        %v959 = vmul.f32 %v447, %v447
        %v960 = vmul.f32 %v448, %v448
        %v961 = vmul.f32 %v449, %v449
        %v962 = vmul.f32 %v450, %v450
        %v963 = vmul.f32 %v451, %v451
        %v964 = vmul.f32 %v452, %v452
        %v965 = vmul.f32 %v453, %v453
        %v966 = vmul.f32 %v454, %v454
        %v967 = vmul.f32 %v455, %v455
        %v968 = vmul.f32 %v456, %v456
        %v969 = vmul.f32 %v457, %v457
        %v970 = vmul.f32 %v458, %v458
        %v971 = vmul.f32 %v459, %v459
        %v972 = vmul.f32 %v460, %v460
        %v973 = vmul.f32 %v461, %v461
        %v974 = vmul.f32 %v462, %v462
        %v975 = vmul.f32 %v463, %v463
        %v976 = vmul.f32 %v464, %v464
        %v977 = vmul.f32 %v465, %v465
        %v978 = vmul.f32 %v466, %v466
        %v979 = vmul.f32 %v467, %v467
        %v980 = vmul.f32 %v468, %v468
        %v981 = vmul.f32 %v469, %v469
        %v982 = vmul.f32 %v470, %v470
        %v983 = vmul.f32 %v471, %v471
        %v984 = vmul.f32 %v472, %v472
        %v985 = vmul.f32 %v473, %v473
        %v986 = vmul.f32 %v474, %v474
        %v987 = vmul.f32 %v475, %v475
        %v988 = vmul.f32 %v476, %v476
        %v989 = vmul.f32 %v477, %v477
        %v990 = vmul.f32 %v478, %v478
        %v991 = vmul.f32 %v479, %v479
        %v992 = vmul.f32 %v480, %v480
        %v993 = vmul.f32 %v481, %v481
        %v994 = vmul.f32 %v482, %v482
        %v995 = vmul.f32 %v483, %v483
        %v996 = vmul.f32 %v484, %v484
        %v997 = vmul.f32 %v485, %v485
        %v998 = vmul.f32 %v486, %v486
        %v999 = vmul.f32 %v487, %v487
        %v1000 = vmul.f32 %v488, %v488
        %v1001 = vmul.f32 %v489, %v489
        %v1002 = vmul.f32 %v490, %v490
        %v1003 = vmul.f32 %v491, %v491
        %v1004 = vmul.f32 %v492, %v492
        %v1005 = vmul.f32 %v493, %v493
        %v1006 = vmul.f32 %v494, %v494
        %v1007 = vmul.f32 %v495, %v495
        %v1008 = vmul.f32 %v496, %v496
        %v1009 = vmul.f32 %v497, %v497
        %v1010 = vmul.f32 %v498, %v498
        %v1011 = vmul.f32 %v499, %v499
        %v1012 = vmul.f32 %v500, %v500
        %v1013 = vmul.f32 %v501, %v501
        %v1014 = vmul.f32 %v502, %v502
        %v1015 = vmul.f32 %v503, %v503
        %v1016 = vmul.f32 %v504, %v504
        %v1017 = vmul.f32 %v505, %v505
        %v1018 = vmul.f32 %v506, %v506
        %v1019 = vmul.f32 %v507, %v507
        %v1020 = vmul.f32 %v508, %v508
        %v1021 = vmul.f32 %v509, %v509
        %v1022 = vmul.f32 %v510, %v510
        %v1023 = vmul.f32 %v511, %v511
        %v1024 = vmul.f32 %v512, %v512
        %v1025 = vmul.f32 %v513, %v513
        %v1026 = vmul.f32 %v514, %v514
        %v1027 = vmul.f32 %v515, %v515
        %v1028 = vmul.f32 %v516, %v516
        %v1029 = vmul.f32 %v517, %v517
        %v1030 = vmul.f32 %v518, %v518
        %v1031 = vmul.f32 %v519, %v519
        %v1032 = vmul.f32 %v520, %v520
        %v1033 = vmul.f32 %v521, %v521
        %v1034 = vmul.f32 %v522, %v522
        %v1035 = vmul.f32 %v523, %v523
        %v1036 = vmul.f32 %v524, %v524
        %v1037 = vmul.f32 %v525, %v525
        %v1038 = vmul.f32 %v526, %v526
        %v1039 = vmul.f32 %v527, %v527
        %v1040 = vmul.f32 %v528, %v528
        %v1041 = vmul.f32 %v529, %v529
        %v1042 = vmul.f32 %v530, %v530
        %v1043 = vmul.f32 %v531, %v531
        %v1044 = vmul.f32 %v532, %v532
        %v1045 = vmul.f32 %v533, %v533
        %v1046 = vmul.f32 %v534, %v534
        %v1047 = vmul.f32 %v535, %v535
        %v1048 = vmul.f32 %v536, %v536
        %v1049 = vmul.f32 %v537, %v537
        %v1050 = vmul.f32 %v538, %v538
        %v1051 = vmul.f32 %v539, %v539
        %v1052 = vmul.f32 %v540, %v540
        %v1053 = vmul.f32 %v541, %v541
        %v1054 = vmul.f32 %v542, %v542
        %v1055 = vmul.f32 %v543, %v543
        %v1056 = vmul.f32 %v544, %v544
        %v1057 = vmul.f32 %v545, %v545
        %v1058 = vmul.f32 %v546, %v546
        %v1059 = vmul.f32 %v547, %v547
        %v1060 = vmul.f32 %v548, %v548
        %v1061 = vmul.f32 %v549, %v549
        %v1062 = vmul.f32 %v550, %v550
        %v1063 = vmul.f32 %v551, %v551
        %v1064 = vmul.f32 %v552, %v552
        %v1065 = vmul.f32 %v553, %v553
        %v1066 = vmul.f32 %v554, %v554
        %v1067 = vmul.f32 %v555, %v555
        %v1068 = vmul.f32 %v556, %v556
        %v1069 = vmul.f32 %v557, %v557
        %v1070 = vmul.f32 %v558, %v558
        %v1071 = vmul.f32 %v559, %v559
        %v1072 = vmul.f32 %v560, %v560
        %v1073 = vmul.f32 %v561, %v561
        %v1074 = vmul.f32 %v562, %v562
        %v1075 = vmul.f32 %v563, %v563
        %v1076 = vmul.f32 %v564, %v564
        %v1077 = vmul.f32 %v565, %v565
        %v1078 = vmul.f32 %v566, %v566
        %v1079 = vmul.f32 %v567, %v567
        %v1080 = vmul.f32 %v568, %v568
        %v1081 = vmul.f32 %v569, %v569
        %v1082 = vmul.f32 %v570, %v570
        %v1083 = vmul.f32 %v571, %v571
        %v1084 = vmul.f32 %v572, %v572
        %v1085 = vmul.f32 %v573, %v573
        %v1086 = vmul.f32 %v574, %v574
        %v1087 = vmul.f32 %v575, %v575
        %v1088 = vmul.f32 %v576, %v576
        %v1089 = vmul.f32 %v577, %v577
        %v1090 = vmul.f32 %v578, %v578
        %v1091 = vmul.f32 %v579, %v579
        %v1092 = vmul.f32 %v580, %v580
        %v1093 = vmul.f32 %v581, %v581
        %v1094 = vmul.f32 %v582, %v582
        %v1095 = vmul.f32 %v583, %v583
        %v1096 = vmul.f32 %v584, %v584
        %v1097 = vmul.f32 %v585, %v585
        %v1098 = vmul.f32 %v586, %v586
        %v1099 = vmul.f32 %v587, %v587
        %v1100 = vmul.f32 %v588, %v588
        %v1101 = vmul.f32 %v589, %v589
        %v1102 = vmul.f32 %v590, %v590
        %v1103 = vmul.f32 %v591, %v591
        %v1104 = vmul.f32 %v592, %v592
        %v1105 = vmul.f32 %v593, %v593
        %v1106 = vmul.f32 %v594, %v594
        %v1107 = vmul.f32 %v595, %v595
        %v1108 = vmul.f32 %v596, %v596
        %v1109 = vmul.f32 %v597, %v597
        %v1110 = vmul.f32 %v598, %v598
        %v1111 = vmul.f32 %v599, %v599
        %v1112 = vmul.f32 %v600, %v600
        %v1113 = vmul.f32 %v601, %v601
        %v1114 = vmul.f32 %v602, %v602
        %v1115 = vmul.f32 %v603, %v603
        %v1116 = vmul.f32 %v604, %v604
        %v1117 = vmul.f32 %v605, %v605
        %v1118 = vmul.f32 %v606, %v606
        %v1119 = vmul.f32 %v607, %v607
        %v1120 = vmul.f32 %v608, %v608
        %v1121 = vmul.f32 %v609, %v609
        %v1122 = vmul.f32 %v610, %v610
        %v1123 = vmul.f32 %v611, %v611
        %v1124 = vmul.f32 %v612, %v612
        %v1125 = vmul.f32 %v613, %v613
        %v1126 = vmul.f32 %v614, %v614
        %v1127 = vmul.f32 %v615, %v615
        %v1128 = vmul.f32 %v616, %v616
        %v1129 = vmul.f32 %v617, %v617
        %v1130 = vmul.f32 %v618, %v618
        %v1131 = vmul.f32 %v619, %v619
        %v1132 = vmul.f32 %v620, %v620
        %v1133 = vmul.f32 %v621, %v621
        %v1134 = vmul.f32 %v622, %v622
        %v1135 = vmul.f32 %v623, %v623
        %v1136 = vmul.f32 %v624, %v624
        %v1137 = vmul.f32 %v625, %v625
        %v1138 = vmul.f32 %v626, %v626
        %v1139 = vmul.f32 %v627, %v627
        %v1140 = vmul.f32 %v628, %v628
        %v1141 = vmul.f32 %v629, %v629
        %v1142 = vmul.f32 %v630, %v630
        %v1143 = vmul.f32 %v631, %v631
        %v1144 = vmul.f32 %v632, %v632
        %v1145 = vmul.f32 %v633, %v633
        %v1146 = vmul.f32 %v634, %v634
        %v1147 = vmul.f32 %v635, %v635
        %v1148 = vmul.f32 %v636, %v636
        %v1149 = vmul.f32 %v637, %v637
        %v1150 = vmul.f32 %v638, %v638
        %v1151 = vmul.f32 %v639, %v639
        %v1152 = vmul.f32 %v640, %v640
        %v1153 = vmul.f32 %v641, %v641
        %v1154 = vmul.f32 %v642, %v642
        %v1155 = vmul.f32 %v643, %v643
        %v1156 = vmul.f32 %v644, %v644
        %v1157 = vmul.f32 %v645, %v645
        %v1158 = vmul.f32 %v646, %v646
        %v1159 = vmul.f32 %v647, %v647
        %v1160 = vmul.f32 %v648, %v648
        %v1161 = vmul.f32 %v649, %v649
        %1162 = vst [vmem:[%s135] sm:$0xff] %v650
        %1163 = vst [vmem:[%s135 + $0x8] sm:$0xff] %v651
        %1164 = vst [vmem:[%s135 + $0x10] sm:$0xff] %v652
        %1165 = vst [vmem:[%s135 + $0x18] sm:$0xff] %v653
        %1166 = vst [vmem:[%s135 + $0x20] sm:$0xff] %v654
        %1167 = vst [vmem:[%s135 + $0x28] sm:$0xff] %v655
        %1168 = vst [vmem:[%s135 + $0x30] sm:$0xff] %v656
        %1169 = vst [vmem:[%s135 + $0x38] sm:$0xff] %v657
        %1170 = vst [vmem:[%s135 + $0x40] sm:$0xff] %v658
        %1171 = vst [vmem:[%s135 + $0x48] sm:$0xff] %v659
        %1172 = vst [vmem:[%s135 + $0x50] sm:$0xff] %v660
        %1173 = vst [vmem:[%s135 + $0x58] sm:$0xff] %v661
        %1174 = vst [vmem:[%s135 + $0x60] sm:$0xff] %v662
        %1175 = vst [vmem:[%s135 + $0x68] sm:$0xff] %v663
        %1176 = vst [vmem:[%s135 + $0x70] sm:$0xff] %v664
        %1177 = vst [vmem:[%s135 + $0x78] sm:$0xff] %v665
        %1178 = vst [vmem:[%s135 + $0x80] sm:$0xff] %v666
        %1179 = vst [vmem:[%s135 + $0x88] sm:$0xff] %v667
        %1180 = vst [vmem:[%s135 + $0x90] sm:$0xff] %v668
        %1181 = vst [vmem:[%s135 + $0x98] sm:$0xff] %v669
        %1182 = vst [vmem:[%s135 + $0xa0] sm:$0xff] %v670
        %1183 = vst [vmem:[%s135 + $0xa8] sm:$0xff] %v671
        %1184 = vst [vmem:[%s135 + $0xb0] sm:$0xff] %v672
        %1185 = vst [vmem:[%s135 + $0xb8] sm:$0xff] %v673
        %1186 = vst [vmem:[%s135 + $0xc0] sm:$0xff] %v674
        %1187 = vst [vmem:[%s135 + $0xc8] sm:$0xff] %v675
        %1188 = vst [vmem:[%s135 + $0xd0] sm:$0xff] %v676
        %1189 = vst [vmem:[%s135 + $0xd8] sm:$0xff] %v677
        %1190 = vst [vmem:[%s135 + $0xe0] sm:$0xff] %v678
        %1191 = vst [vmem:[%s135 + $0xe8] sm:$0xff] %v679
        %1192 = vst [vmem:[%s135 + $0xf0] sm:$0xff] %v680
        %1193 = vst [vmem:[%s135 + $0xf8] sm:$0xff] %v681
        %1194 = vst [vmem:[%s135 + $0x100] sm:$0xff] %v682
        %1195 = vst [vmem:[%s135 + $0x108] sm:$0xff] %v683
        %1196 = vst [vmem:[%s135 + $0x110] sm:$0xff] %v684
        %1197 = vst [vmem:[%s135 + $0x118] sm:$0xff] %v685
        %1198 = vst [vmem:[%s135 + $0x120] sm:$0xff] %v686
        %1199 = vst [vmem:[%s135 + $0x128] sm:$0xff] %v687
        %1200 = vst [vmem:[%s135 + $0x130] sm:$0xff] %v688
        %1201 = vst [vmem:[%s135 + $0x138] sm:$0xff] %v689
        %1202 = vst [vmem:[%s135 + $0x140] sm:$0xff] %v690
        %1203 = vst [vmem:[%s135 + $0x148] sm:$0xff] %v691
        %1204 = vst [vmem:[%s135 + $0x150] sm:$0xff] %v692
        %1205 = vst [vmem:[%s135 + $0x158] sm:$0xff] %v693
        %1206 = vst [vmem:[%s135 + $0x160] sm:$0xff] %v694
        %1207 = vst [vmem:[%s135 + $0x168] sm:$0xff] %v695
        %1208 = vst [vmem:[%s135 + $0x170] sm:$0xff] %v696
        %1209 = vst [vmem:[%s135 + $0x178] sm:$0xff] %v697
        %1210 = vst [vmem:[%s135 + $0x180] sm:$0xff] %v698
        %1211 = vst [vmem:[%s135 + $0x188] sm:$0xff] %v699
        %1212 = vst [vmem:[%s135 + $0x190] sm:$0xff] %v700
        %1213 = vst [vmem:[%s135 + $0x198] sm:$0xff] %v701
        %1214 = vst [vmem:[%s135 + $0x1a0] sm:$0xff] %v702
        %1215 = vst [vmem:[%s135 + $0x1a8] sm:$0xff] %v703
        %1216 = vst [vmem:[%s135 + $0x1b0] sm:$0xff] %v704
        %1217 = vst [vmem:[%s135 + $0x1b8] sm:$0xff] %v705
        %1218 = vst [vmem:[%s135 + $0x1c0] sm:$0xff] %v706
        %1219 = vst [vmem:[%s135 + $0x1c8] sm:$0xff] %v707
        %1220 = vst [vmem:[%s135 + $0x1d0] sm:$0xff] %v708
        %1221 = vst [vmem:[%s135 + $0x1d8] sm:$0xff] %v709
        %1222 = vst [vmem:[%s135 + $0x1e0] sm:$0xff] %v710
        %1223 = vst [vmem:[%s135 + $0x1e8] sm:$0xff] %v711
        %1224 = vst [vmem:[%s135 + $0x1f0] sm:$0xff] %v712
        %1225 = vst [vmem:[%s135 + $0x1f8] sm:$0xff] %v713
        %1226 = vst [vmem:[%s135 + $0x200] sm:$0xff] %v714
        %1227 = vst [vmem:[%s135 + $0x208] sm:$0xff] %v715
        %1228 = vst [vmem:[%s135 + $0x210] sm:$0xff] %v716
        %1229 = vst [vmem:[%s135 + $0x218] sm:$0xff] %v717
        %1230 = vst [vmem:[%s135 + $0x220] sm:$0xff] %v718
        %1231 = vst [vmem:[%s135 + $0x228] sm:$0xff] %v719
        %1232 = vst [vmem:[%s135 + $0x230] sm:$0xff] %v720
        %1233 = vst [vmem:[%s135 + $0x238] sm:$0xff] %v721
        %1234 = vst [vmem:[%s135 + $0x240] sm:$0xff] %v722
        %1235 = vst [vmem:[%s135 + $0x248] sm:$0xff] %v723
        %1236 = vst [vmem:[%s135 + $0x250] sm:$0xff] %v724
        %1237 = vst [vmem:[%s135 + $0x258] sm:$0xff] %v725
        %1238 = vst [vmem:[%s135 + $0x260] sm:$0xff] %v726
        %1239 = vst [vmem:[%s135 + $0x268] sm:$0xff] %v727
        %1240 = vst [vmem:[%s135 + $0x270] sm:$0xff] %v728
        %1241 = vst [vmem:[%s135 + $0x278] sm:$0xff] %v729
        %1242 = vst [vmem:[%s135 + $0x280] sm:$0xff] %v730
        %1243 = vst [vmem:[%s135 + $0x288] sm:$0xff] %v731
        %1244 = vst [vmem:[%s135 + $0x290] sm:$0xff] %v732
        %1245 = vst [vmem:[%s135 + $0x298] sm:$0xff] %v733
        %1246 = vst [vmem:[%s135 + $0x2a0] sm:$0xff] %v734
        %1247 = vst [vmem:[%s135 + $0x2a8] sm:$0xff] %v735
        %1248 = vst [vmem:[%s135 + $0x2b0] sm:$0xff] %v736
        %1249 = vst [vmem:[%s135 + $0x2b8] sm:$0xff] %v737
        %1250 = vst [vmem:[%s135 + $0x2c0] sm:$0xff] %v738
        %1251 = vst [vmem:[%s135 + $0x2c8] sm:$0xff] %v739
        %1252 = vst [vmem:[%s135 + $0x2d0] sm:$0xff] %v740
        %1253 = vst [vmem:[%s135 + $0x2d8] sm:$0xff] %v741
        %1254 = vst [vmem:[%s135 + $0x2e0] sm:$0xff] %v742
        %1255 = vst [vmem:[%s135 + $0x2e8] sm:$0xff] %v743
        %1256 = vst [vmem:[%s135 + $0x2f0] sm:$0xff] %v744
        %1257 = vst [vmem:[%s135 + $0x2f8] sm:$0xff] %v745
        %1258 = vst [vmem:[%s135 + $0x300] sm:$0xff] %v746
        %1259 = vst [vmem:[%s135 + $0x308] sm:$0xff] %v747
        %1260 = vst [vmem:[%s135 + $0x310] sm:$0xff] %v748
        %1261 = vst [vmem:[%s135 + $0x318] sm:$0xff] %v749
        %1262 = vst [vmem:[%s135 + $0x320] sm:$0xff] %v750
        %1263 = vst [vmem:[%s135 + $0x328] sm:$0xff] %v751
        %1264 = vst [vmem:[%s135 + $0x330] sm:$0xff] %v752
        %1265 = vst [vmem:[%s135 + $0x338] sm:$0xff] %v753
        %1266 = vst [vmem:[%s135 + $0x340] sm:$0xff] %v754
        %1267 = vst [vmem:[%s135 + $0x348] sm:$0xff] %v755
        %1268 = vst [vmem:[%s135 + $0x350] sm:$0xff] %v756
        %1269 = vst [vmem:[%s135 + $0x358] sm:$0xff] %v757
        %1270 = vst [vmem:[%s135 + $0x360] sm:$0xff] %v758
        %1271 = vst [vmem:[%s135 + $0x368] sm:$0xff] %v759
        %1272 = vst [vmem:[%s135 + $0x370] sm:$0xff] %v760
        %1273 = vst [vmem:[%s135 + $0x378] sm:$0xff] %v761
        %1274 = vst [vmem:[%s135 + $0x380] sm:$0xff] %v762
        %1275 = vst [vmem:[%s135 + $0x388] sm:$0xff] %v763
        %1276 = vst [vmem:[%s135 + $0x390] sm:$0xff] %v764
        %1277 = vst [vmem:[%s135 + $0x398] sm:$0xff] %v765
        %1278 = vst [vmem:[%s135 + $0x3a0] sm:$0xff] %v766
        %1279 = vst [vmem:[%s135 + $0x3a8] sm:$0xff] %v767
        %1280 = vst [vmem:[%s135 + $0x3b0] sm:$0xff] %v768
        %1281 = vst [vmem:[%s135 + $0x3b8] sm:$0xff] %v769
        %1282 = vst [vmem:[%s135 + $0x3c0] sm:$0xff] %v770
        %1283 = vst [vmem:[%s135 + $0x3c8] sm:$0xff] %v771
        %1284 = vst [vmem:[%s135 + $0x3d0] sm:$0xff] %v772
        %1285 = vst [vmem:[%s135 + $0x3d8] sm:$0xff] %v773
        %1286 = vst [vmem:[%s135 + $0x3e0] sm:$0xff] %v774
        %1287 = vst [vmem:[%s135 + $0x3e8] sm:$0xff] %v775
        %1288 = vst [vmem:[%s135 + $0x3f0] sm:$0xff] %v776
        %1289 = vst [vmem:[%s135 + $0x3f8] sm:$0xff] %v777
        %1290 = vst [vmem:[%s135 + $0x400] sm:$0xff] %v778
        %1291 = vst [vmem:[%s135 + $0x408] sm:$0xff] %v779
        %1292 = vst [vmem:[%s135 + $0x410] sm:$0xff] %v780
        %1293 = vst [vmem:[%s135 + $0x418] sm:$0xff] %v781
        %1294 = vst [vmem:[%s135 + $0x420] sm:$0xff] %v782
        %1295 = vst [vmem:[%s135 + $0x428] sm:$0xff] %v783
        %1296 = vst [vmem:[%s135 + $0x430] sm:$0xff] %v784
        %1297 = vst [vmem:[%s135 + $0x438] sm:$0xff] %v785
        %1298 = vst [vmem:[%s135 + $0x440] sm:$0xff] %v786
        %1299 = vst [vmem:[%s135 + $0x448] sm:$0xff] %v787
        %1300 = vst [vmem:[%s135 + $0x450] sm:$0xff] %v788
        %1301 = vst [vmem:[%s135 + $0x458] sm:$0xff] %v789
        %1302 = vst [vmem:[%s135 + $0x460] sm:$0xff] %v790
        %1303 = vst [vmem:[%s135 + $0x468] sm:$0xff] %v791
        %1304 = vst [vmem:[%s135 + $0x470] sm:$0xff] %v792
        %1305 = vst [vmem:[%s135 + $0x478] sm:$0xff] %v793
        %1306 = vst [vmem:[%s135 + $0x480] sm:$0xff] %v794
        %1307 = vst [vmem:[%s135 + $0x488] sm:$0xff] %v795
        %1308 = vst [vmem:[%s135 + $0x490] sm:$0xff] %v796
        %1309 = vst [vmem:[%s135 + $0x498] sm:$0xff] %v797
        %1310 = vst [vmem:[%s135 + $0x4a0] sm:$0xff] %v798
        %1311 = vst [vmem:[%s135 + $0x4a8] sm:$0xff] %v799
        %1312 = vst [vmem:[%s135 + $0x4b0] sm:$0xff] %v800
        %1313 = vst [vmem:[%s135 + $0x4b8] sm:$0xff] %v801
        %1314 = vst [vmem:[%s135 + $0x4c0] sm:$0xff] %v802
        %1315 = vst [vmem:[%s135 + $0x4c8] sm:$0xff] %v803
        %1316 = vst [vmem:[%s135 + $0x4d0] sm:$0xff] %v804
        %1317 = vst [vmem:[%s135 + $0x4d8] sm:$0xff] %v805
        %1318 = vst [vmem:[%s135 + $0x4e0] sm:$0xff] %v806
        %1319 = vst [vmem:[%s135 + $0x4e8] sm:$0xff] %v807
        %1320 = vst [vmem:[%s135 + $0x4f0] sm:$0xff] %v808
        %1321 = vst [vmem:[%s135 + $0x4f8] sm:$0xff] %v809
        %1322 = vst [vmem:[%s135 + $0x500] sm:$0xff] %v810
        %1323 = vst [vmem:[%s135 + $0x508] sm:$0xff] %v811
        %1324 = vst [vmem:[%s135 + $0x510] sm:$0xff] %v812
        %1325 = vst [vmem:[%s135 + $0x518] sm:$0xff] %v813
        %1326 = vst [vmem:[%s135 + $0x520] sm:$0xff] %v814
        %1327 = vst [vmem:[%s135 + $0x528] sm:$0xff] %v815
        %1328 = vst [vmem:[%s135 + $0x530] sm:$0xff] %v816
        %1329 = vst [vmem:[%s135 + $0x538] sm:$0xff] %v817
        %1330 = vst [vmem:[%s135 + $0x540] sm:$0xff] %v818
        %1331 = vst [vmem:[%s135 + $0x548] sm:$0xff] %v819
        %1332 = vst [vmem:[%s135 + $0x550] sm:$0xff] %v820
        %1333 = vst [vmem:[%s135 + $0x558] sm:$0xff] %v821
        %1334 = vst [vmem:[%s135 + $0x560] sm:$0xff] %v822
        %1335 = vst [vmem:[%s135 + $0x568] sm:$0xff] %v823
        %1336 = vst [vmem:[%s135 + $0x570] sm:$0xff] %v824
        %1337 = vst [vmem:[%s135 + $0x578] sm:$0xff] %v825
        %1338 = vst [vmem:[%s135 + $0x580] sm:$0xff] %v826
        %1339 = vst [vmem:[%s135 + $0x588] sm:$0xff] %v827
        %1340 = vst [vmem:[%s135 + $0x590] sm:$0xff] %v828
        %1341 = vst [vmem:[%s135 + $0x598] sm:$0xff] %v829
        %1342 = vst [vmem:[%s135 + $0x5a0] sm:$0xff] %v830
        %1343 = vst [vmem:[%s135 + $0x5a8] sm:$0xff] %v831
        %1344 = vst [vmem:[%s135 + $0x5b0] sm:$0xff] %v832
        %1345 = vst [vmem:[%s135 + $0x5b8] sm:$0xff] %v833
        %1346 = vst [vmem:[%s135 + $0x5c0] sm:$0xff] %v834
        %1347 = vst [vmem:[%s135 + $0x5c8] sm:$0xff] %v835
        %1348 = vst [vmem:[%s135 + $0x5d0] sm:$0xff] %v836
        %1349 = vst [vmem:[%s135 + $0x5d8] sm:$0xff] %v837
        %1350 = vst [vmem:[%s135 + $0x5e0] sm:$0xff] %v838
        %1351 = vst [vmem:[%s135 + $0x5e8] sm:$0xff] %v839
        %1352 = vst [vmem:[%s135 + $0x5f0] sm:$0xff] %v840
        %1353 = vst [vmem:[%s135 + $0x5f8] sm:$0xff] %v841
        %1354 = vst [vmem:[%s135 + $0x600] sm:$0xff] %v842
        %1355 = vst [vmem:[%s135 + $0x608] sm:$0xff] %v843
        %1356 = vst [vmem:[%s135 + $0x610] sm:$0xff] %v844
        %1357 = vst [vmem:[%s135 + $0x618] sm:$0xff] %v845
        %1358 = vst [vmem:[%s135 + $0x620] sm:$0xff] %v846
        %1359 = vst [vmem:[%s135 + $0x628] sm:$0xff] %v847
        %1360 = vst [vmem:[%s135 + $0x630] sm:$0xff] %v848
        %1361 = vst [vmem:[%s135 + $0x638] sm:$0xff] %v849
        %1362 = vst [vmem:[%s135 + $0x640] sm:$0xff] %v850
        %1363 = vst [vmem:[%s135 + $0x648] sm:$0xff] %v851
        %1364 = vst [vmem:[%s135 + $0x650] sm:$0xff] %v852
        %1365 = vst [vmem:[%s135 + $0x658] sm:$0xff] %v853
        %1366 = vst [vmem:[%s135 + $0x660] sm:$0xff] %v854
        %1367 = vst [vmem:[%s135 + $0x668] sm:$0xff] %v855
        %1368 = vst [vmem:[%s135 + $0x670] sm:$0xff] %v856
        %1369 = vst [vmem:[%s135 + $0x678] sm:$0xff] %v857
        %1370 = vst [vmem:[%s135 + $0x680] sm:$0xff] %v858
        %1371 = vst [vmem:[%s135 + $0x688] sm:$0xff] %v859
        %1372 = vst [vmem:[%s135 + $0x690] sm:$0xff] %v860
        %1373 = vst [vmem:[%s135 + $0x698] sm:$0xff] %v861
        %1374 = vst [vmem:[%s135 + $0x6a0] sm:$0xff] %v862
        %1375 = vst [vmem:[%s135 + $0x6a8] sm:$0xff] %v863
        %1376 = vst [vmem:[%s135 + $0x6b0] sm:$0xff] %v864
        %1377 = vst [vmem:[%s135 + $0x6b8] sm:$0xff] %v865
        %1378 = vst [vmem:[%s135 + $0x6c0] sm:$0xff] %v866
        %1379 = vst [vmem:[%s135 + $0x6c8] sm:$0xff] %v867
        %1380 = vst [vmem:[%s135 + $0x6d0] sm:$0xff] %v868
        %1381 = vst [vmem:[%s135 + $0x6d8] sm:$0xff] %v869
        %1382 = vst [vmem:[%s135 + $0x6e0] sm:$0xff] %v870
        %1383 = vst [vmem:[%s135 + $0x6e8] sm:$0xff] %v871
        %1384 = vst [vmem:[%s135 + $0x6f0] sm:$0xff] %v872
        %1385 = vst [vmem:[%s135 + $0x6f8] sm:$0xff] %v873
        %1386 = vst [vmem:[%s135 + $0x700] sm:$0xff] %v874
        %1387 = vst [vmem:[%s135 + $0x708] sm:$0xff] %v875
        %1388 = vst [vmem:[%s135 + $0x710] sm:$0xff] %v876
        %1389 = vst [vmem:[%s135 + $0x718] sm:$0xff] %v877
        %1390 = vst [vmem:[%s135 + $0x720] sm:$0xff] %v878
        %1391 = vst [vmem:[%s135 + $0x728] sm:$0xff] %v879
        %1392 = vst [vmem:[%s135 + $0x730] sm:$0xff] %v880
        %1393 = vst [vmem:[%s135 + $0x738] sm:$0xff] %v881
        %1394 = vst [vmem:[%s135 + $0x740] sm:$0xff] %v882
        %1395 = vst [vmem:[%s135 + $0x748] sm:$0xff] %v883
        %1396 = vst [vmem:[%s135 + $0x750] sm:$0xff] %v884
        %1397 = vst [vmem:[%s135 + $0x758] sm:$0xff] %v885
        %1398 = vst [vmem:[%s135 + $0x760] sm:$0xff] %v886
        %1399 = vst [vmem:[%s135 + $0x768] sm:$0xff] %v887
        %1400 = vst [vmem:[%s135 + $0x770] sm:$0xff] %v888
        %1401 = vst [vmem:[%s135 + $0x778] sm:$0xff] %v889
        %1402 = vst [vmem:[%s135 + $0x780] sm:$0xff] %v890
        %1403 = vst [vmem:[%s135 + $0x788] sm:$0xff] %v891
        %1404 = vst [vmem:[%s135 + $0x790] sm:$0xff] %v892
        %1405 = vst [vmem:[%s135 + $0x798] sm:$0xff] %v893
        %1406 = vst [vmem:[%s135 + $0x7a0] sm:$0xff] %v894
        %1407 = vst [vmem:[%s135 + $0x7a8] sm:$0xff] %v895
        %1408 = vst [vmem:[%s135 + $0x7b0] sm:$0xff] %v896
        %1409 = vst [vmem:[%s135 + $0x7b8] sm:$0xff] %v897
        %1410 = vst [vmem:[%s135 + $0x7c0] sm:$0xff] %v898
        %1411 = vst [vmem:[%s135 + $0x7c8] sm:$0xff] %v899
        %1412 = vst [vmem:[%s135 + $0x7d0] sm:$0xff] %v900
        %1413 = vst [vmem:[%s135 + $0x7d8] sm:$0xff] %v901
        %1414 = vst [vmem:[%s135 + $0x7e0] sm:$0xff] %v902
        %1415 = vst [vmem:[%s135 + $0x7e8] sm:$0xff] %v903
        %1416 = vst [vmem:[%s135 + $0x7f0] sm:$0xff] %v904
        %1417 = vst [vmem:[%s135 + $0x7f8] sm:$0xff] %v905
        %1418 = vst [vmem:[%s135 + $0x800] sm:$0xff] %v906
        %1419 = vst [vmem:[%s135 + $0x808] sm:$0xff] %v907
        %1420 = vst [vmem:[%s135 + $0x810] sm:$0xff] %v908
        %1421 = vst [vmem:[%s135 + $0x818] sm:$0xff] %v909
        %1422 = vst [vmem:[%s135 + $0x820] sm:$0xff] %v910
        %1423 = vst [vmem:[%s135 + $0x828] sm:$0xff] %v911
        %1424 = vst [vmem:[%s135 + $0x830] sm:$0xff] %v912
        %1425 = vst [vmem:[%s135 + $0x838] sm:$0xff] %v913
        %1426 = vst [vmem:[%s135 + $0x840] sm:$0xff] %v914
        %1427 = vst [vmem:[%s135 + $0x848] sm:$0xff] %v915
        %1428 = vst [vmem:[%s135 + $0x850] sm:$0xff] %v916
        %1429 = vst [vmem:[%s135 + $0x858] sm:$0xff] %v917
        %1430 = vst [vmem:[%s135 + $0x860] sm:$0xff] %v918
        %1431 = vst [vmem:[%s135 + $0x868] sm:$0xff] %v919
        %1432 = vst [vmem:[%s135 + $0x870] sm:$0xff] %v920
        %1433 = vst [vmem:[%s135 + $0x878] sm:$0xff] %v921
        %1434 = vst [vmem:[%s135 + $0x880] sm:$0xff] %v922
        %1435 = vst [vmem:[%s135 + $0x888] sm:$0xff] %v923
        %1436 = vst [vmem:[%s135 + $0x890] sm:$0xff] %v924
        %1437 = vst [vmem:[%s135 + $0x898] sm:$0xff] %v925
        %1438 = vst [vmem:[%s135 + $0x8a0] sm:$0xff] %v926
        %1439 = vst [vmem:[%s135 + $0x8a8] sm:$0xff] %v927
        %1440 = vst [vmem:[%s135 + $0x8b0] sm:$0xff] %v928
        %1441 = vst [vmem:[%s135 + $0x8b8] sm:$0xff] %v929
        %1442 = vst [vmem:[%s135 + $0x8c0] sm:$0xff] %v930
        %1443 = vst [vmem:[%s135 + $0x8c8] sm:$0xff] %v931
        %1444 = vst [vmem:[%s135 + $0x8d0] sm:$0xff] %v932
        %1445 = vst [vmem:[%s135 + $0x8d8] sm:$0xff] %v933
        %1446 = vst [vmem:[%s135 + $0x8e0] sm:$0xff] %v934
        %1447 = vst [vmem:[%s135 + $0x8e8] sm:$0xff] %v935
        %1448 = vst [vmem:[%s135 + $0x8f0] sm:$0xff] %v936
        %1449 = vst [vmem:[%s135 + $0x8f8] sm:$0xff] %v937
        %1450 = vst [vmem:[%s135 + $0x900] sm:$0xff] %v938
        %1451 = vst [vmem:[%s135 + $0x908] sm:$0xff] %v939
        %1452 = vst [vmem:[%s135 + $0x910] sm:$0xff] %v940
        %1453 = vst [vmem:[%s135 + $0x918] sm:$0xff] %v941
        %1454 = vst [vmem:[%s135 + $0x920] sm:$0xff] %v942
        %1455 = vst [vmem:[%s135 + $0x928] sm:$0xff] %v943
        %1456 = vst [vmem:[%s135 + $0x930] sm:$0xff] %v944
        %1457 = vst [vmem:[%s135 + $0x938] sm:$0xff] %v945
        %1458 = vst [vmem:[%s135 + $0x940] sm:$0xff] %v946
        %1459 = vst [vmem:[%s135 + $0x948] sm:$0xff] %v947
        %1460 = vst [vmem:[%s135 + $0x950] sm:$0xff] %v948
        %1461 = vst [vmem:[%s135 + $0x958] sm:$0xff] %v949
        %1462 = vst [vmem:[%s135 + $0x960] sm:$0xff] %v950
        %1463 = vst [vmem:[%s135 + $0x968] sm:$0xff] %v951
        %1464 = vst [vmem:[%s135 + $0x970] sm:$0xff] %v952
        %1465 = vst [vmem:[%s135 + $0x978] sm:$0xff] %v953
        %1466 = vst [vmem:[%s135 + $0x980] sm:$0xff] %v954
        %1467 = vst [vmem:[%s135 + $0x988] sm:$0xff] %v955
        %1468 = vst [vmem:[%s135 + $0x990] sm:$0xff] %v956
        %1469 = vst [vmem:[%s135 + $0x998] sm:$0xff] %v957
        %1470 = vst [vmem:[%s135 + $0x9a0] sm:$0xff] %v958
        %1471 = vst [vmem:[%s135 + $0x9a8] sm:$0xff] %v959
        %1472 = vst [vmem:[%s135 + $0x9b0] sm:$0xff] %v960
        %1473 = vst [vmem:[%s135 + $0x9b8] sm:$0xff] %v961
        %1474 = vst [vmem:[%s135 + $0x9c0] sm:$0xff] %v962
        %1475 = vst [vmem:[%s135 + $0x9c8] sm:$0xff] %v963
        %1476 = vst [vmem:[%s135 + $0x9d0] sm:$0xff] %v964
        %1477 = vst [vmem:[%s135 + $0x9d8] sm:$0xff] %v965
        %1478 = vst [vmem:[%s135 + $0x9e0] sm:$0xff] %v966
        %1479 = vst [vmem:[%s135 + $0x9e8] sm:$0xff] %v967
        %1480 = vst [vmem:[%s135 + $0x9f0] sm:$0xff] %v968
        %1481 = vst [vmem:[%s135 + $0x9f8] sm:$0xff] %v969
        %1482 = vst [vmem:[%s135 + $0xa00] sm:$0xff] %v970
        %1483 = vst [vmem:[%s135 + $0xa08] sm:$0xff] %v971
        %1484 = vst [vmem:[%s135 + $0xa10] sm:$0xff] %v972
        %1485 = vst [vmem:[%s135 + $0xa18] sm:$0xff] %v973
        %1486 = vst [vmem:[%s135 + $0xa20] sm:$0xff] %v974
        %1487 = vst [vmem:[%s135 + $0xa28] sm:$0xff] %v975
        %1488 = vst [vmem:[%s135 + $0xa30] sm:$0xff] %v976
        %1489 = vst [vmem:[%s135 + $0xa38] sm:$0xff] %v977
        %1490 = vst [vmem:[%s135 + $0xa40] sm:$0xff] %v978
        %1491 = vst [vmem:[%s135 + $0xa48] sm:$0xff] %v979
        %1492 = vst [vmem:[%s135 + $0xa50] sm:$0xff] %v980
        %1493 = vst [vmem:[%s135 + $0xa58] sm:$0xff] %v981
        %1494 = vst [vmem:[%s135 + $0xa60] sm:$0xff] %v982
        %1495 = vst [vmem:[%s135 + $0xa68] sm:$0xff] %v983
        %1496 = vst [vmem:[%s135 + $0xa70] sm:$0xff] %v984
        %1497 = vst [vmem:[%s135 + $0xa78] sm:$0xff] %v985
        %1498 = vst [vmem:[%s135 + $0xa80] sm:$0xff] %v986
        %1499 = vst [vmem:[%s135 + $0xa88] sm:$0xff] %v987
        %1500 = vst [vmem:[%s135 + $0xa90] sm:$0xff] %v988
        %1501 = vst [vmem:[%s135 + $0xa98] sm:$0xff] %v989
        %1502 = vst [vmem:[%s135 + $0xaa0] sm:$0xff] %v990
        %1503 = vst [vmem:[%s135 + $0xaa8] sm:$0xff] %v991
        %1504 = vst [vmem:[%s135 + $0xab0] sm:$0xff] %v992
        %1505 = vst [vmem:[%s135 + $0xab8] sm:$0xff] %v993
        %1506 = vst [vmem:[%s135 + $0xac0] sm:$0xff] %v994
        %1507 = vst [vmem:[%s135 + $0xac8] sm:$0xff] %v995
        %1508 = vst [vmem:[%s135 + $0xad0] sm:$0xff] %v996
        %1509 = vst [vmem:[%s135 + $0xad8] sm:$0xff] %v997
        %1510 = vst [vmem:[%s135 + $0xae0] sm:$0xff] %v998
        %1511 = vst [vmem:[%s135 + $0xae8] sm:$0xff] %v999
        %1512 = vst [vmem:[%s135 + $0xaf0] sm:$0xff] %v1000
        %1513 = vst [vmem:[%s135 + $0xaf8] sm:$0xff] %v1001
        %1514 = vst [vmem:[%s135 + $0xb00] sm:$0xff] %v1002
        %1515 = vst [vmem:[%s135 + $0xb08] sm:$0xff] %v1003
        %1516 = vst [vmem:[%s135 + $0xb10] sm:$0xff] %v1004
        %1517 = vst [vmem:[%s135 + $0xb18] sm:$0xff] %v1005
        %1518 = vst [vmem:[%s135 + $0xb20] sm:$0xff] %v1006
        %1519 = vst [vmem:[%s135 + $0xb28] sm:$0xff] %v1007
        %1520 = vst [vmem:[%s135 + $0xb30] sm:$0xff] %v1008
        %1521 = vst [vmem:[%s135 + $0xb38] sm:$0xff] %v1009
        %1522 = vst [vmem:[%s135 + $0xb40] sm:$0xff] %v1010
        %1523 = vst [vmem:[%s135 + $0xb48] sm:$0xff] %v1011
        %1524 = vst [vmem:[%s135 + $0xb50] sm:$0xff] %v1012
        %1525 = vst [vmem:[%s135 + $0xb58] sm:$0xff] %v1013
        %1526 = vst [vmem:[%s135 + $0xb60] sm:$0xff] %v1014
        %1527 = vst [vmem:[%s135 + $0xb68] sm:$0xff] %v1015
        %1528 = vst [vmem:[%s135 + $0xb70] sm:$0xff] %v1016
        %1529 = vst [vmem:[%s135 + $0xb78] sm:$0xff] %v1017
        %1530 = vst [vmem:[%s135 + $0xb80] sm:$0xff] %v1018
        %1531 = vst [vmem:[%s135 + $0xb88] sm:$0xff] %v1019
        %1532 = vst [vmem:[%s135 + $0xb90] sm:$0xff] %v1020
        %1533 = vst [vmem:[%s135 + $0xb98] sm:$0xff] %v1021
        %1534 = vst [vmem:[%s135 + $0xba0] sm:$0xff] %v1022
        %1535 = vst [vmem:[%s135 + $0xba8] sm:$0xff] %v1023
        %1536 = vst [vmem:[%s135 + $0xbb0] sm:$0xff] %v1024
        %1537 = vst [vmem:[%s135 + $0xbb8] sm:$0xff] %v1025
        %1538 = vst [vmem:[%s135 + $0xbc0] sm:$0xff] %v1026
        %1539 = vst [vmem:[%s135 + $0xbc8] sm:$0xff] %v1027
        %1540 = vst [vmem:[%s135 + $0xbd0] sm:$0xff] %v1028
        %1541 = vst [vmem:[%s135 + $0xbd8] sm:$0xff] %v1029
        %1542 = vst [vmem:[%s135 + $0xbe0] sm:$0xff] %v1030
        %1543 = vst [vmem:[%s135 + $0xbe8] sm:$0xff] %v1031
        %1544 = vst [vmem:[%s135 + $0xbf0] sm:$0xff] %v1032
        %1545 = vst [vmem:[%s135 + $0xbf8] sm:$0xff] %v1033
        %1546 = vst [vmem:[%s135 + $0xc00] sm:$0xff] %v1034
        %1547 = vst [vmem:[%s135 + $0xc08] sm:$0xff] %v1035
        %1548 = vst [vmem:[%s135 + $0xc10] sm:$0xff] %v1036
        %1549 = vst [vmem:[%s135 + $0xc18] sm:$0xff] %v1037
        %1550 = vst [vmem:[%s135 + $0xc20] sm:$0xff] %v1038
        %1551 = vst [vmem:[%s135 + $0xc28] sm:$0xff] %v1039
        %1552 = vst [vmem:[%s135 + $0xc30] sm:$0xff] %v1040
        %1553 = vst [vmem:[%s135 + $0xc38] sm:$0xff] %v1041
        %1554 = vst [vmem:[%s135 + $0xc40] sm:$0xff] %v1042
        %1555 = vst [vmem:[%s135 + $0xc48] sm:$0xff] %v1043
        %1556 = vst [vmem:[%s135 + $0xc50] sm:$0xff] %v1044
        %1557 = vst [vmem:[%s135 + $0xc58] sm:$0xff] %v1045
        %1558 = vst [vmem:[%s135 + $0xc60] sm:$0xff] %v1046
        %1559 = vst [vmem:[%s135 + $0xc68] sm:$0xff] %v1047
        %1560 = vst [vmem:[%s135 + $0xc70] sm:$0xff] %v1048
        %1561 = vst [vmem:[%s135 + $0xc78] sm:$0xff] %v1049
        %1562 = vst [vmem:[%s135 + $0xc80] sm:$0xff] %v1050
        %1563 = vst [vmem:[%s135 + $0xc88] sm:$0xff] %v1051
        %1564 = vst [vmem:[%s135 + $0xc90] sm:$0xff] %v1052
        %1565 = vst [vmem:[%s135 + $0xc98] sm:$0xff] %v1053
        %1566 = vst [vmem:[%s135 + $0xca0] sm:$0xff] %v1054
        %1567 = vst [vmem:[%s135 + $0xca8] sm:$0xff] %v1055
        %1568 = vst [vmem:[%s135 + $0xcb0] sm:$0xff] %v1056
        %1569 = vst [vmem:[%s135 + $0xcb8] sm:$0xff] %v1057
        %1570 = vst [vmem:[%s135 + $0xcc0] sm:$0xff] %v1058
        %1571 = vst [vmem:[%s135 + $0xcc8] sm:$0xff] %v1059
        %1572 = vst [vmem:[%s135 + $0xcd0] sm:$0xff] %v1060
        %1573 = vst [vmem:[%s135 + $0xcd8] sm:$0xff] %v1061
        %1574 = vst [vmem:[%s135 + $0xce0] sm:$0xff] %v1062
        %1575 = vst [vmem:[%s135 + $0xce8] sm:$0xff] %v1063
        %1576 = vst [vmem:[%s135 + $0xcf0] sm:$0xff] %v1064
        %1577 = vst [vmem:[%s135 + $0xcf8] sm:$0xff] %v1065
        %1578 = vst [vmem:[%s135 + $0xd00] sm:$0xff] %v1066
        %1579 = vst [vmem:[%s135 + $0xd08] sm:$0xff] %v1067
        %1580 = vst [vmem:[%s135 + $0xd10] sm:$0xff] %v1068
        %1581 = vst [vmem:[%s135 + $0xd18] sm:$0xff] %v1069
        %1582 = vst [vmem:[%s135 + $0xd20] sm:$0xff] %v1070
        %1583 = vst [vmem:[%s135 + $0xd28] sm:$0xff] %v1071
        %1584 = vst [vmem:[%s135 + $0xd30] sm:$0xff] %v1072
        %1585 = vst [vmem:[%s135 + $0xd38] sm:$0xff] %v1073
        %1586 = vst [vmem:[%s135 + $0xd40] sm:$0xff] %v1074
        %1587 = vst [vmem:[%s135 + $0xd48] sm:$0xff] %v1075
        %1588 = vst [vmem:[%s135 + $0xd50] sm:$0xff] %v1076
        %1589 = vst [vmem:[%s135 + $0xd58] sm:$0xff] %v1077
        %1590 = vst [vmem:[%s135 + $0xd60] sm:$0xff] %v1078
        %1591 = vst [vmem:[%s135 + $0xd68] sm:$0xff] %v1079
        %1592 = vst [vmem:[%s135 + $0xd70] sm:$0xff] %v1080
        %1593 = vst [vmem:[%s135 + $0xd78] sm:$0xff] %v1081
        %1594 = vst [vmem:[%s135 + $0xd80] sm:$0xff] %v1082
        %1595 = vst [vmem:[%s135 + $0xd88] sm:$0xff] %v1083
        %1596 = vst [vmem:[%s135 + $0xd90] sm:$0xff] %v1084
        %1597 = vst [vmem:[%s135 + $0xd98] sm:$0xff] %v1085
        %1598 = vst [vmem:[%s135 + $0xda0] sm:$0xff] %v1086
        %1599 = vst [vmem:[%s135 + $0xda8] sm:$0xff] %v1087
        %1600 = vst [vmem:[%s135 + $0xdb0] sm:$0xff] %v1088
        %1601 = vst [vmem:[%s135 + $0xdb8] sm:$0xff] %v1089
        %1602 = vst [vmem:[%s135 + $0xdc0] sm:$0xff] %v1090
        %1603 = vst [vmem:[%s135 + $0xdc8] sm:$0xff] %v1091
        %1604 = vst [vmem:[%s135 + $0xdd0] sm:$0xff] %v1092
        %1605 = vst [vmem:[%s135 + $0xdd8] sm:$0xff] %v1093
        %1606 = vst [vmem:[%s135 + $0xde0] sm:$0xff] %v1094
        %1607 = vst [vmem:[%s135 + $0xde8] sm:$0xff] %v1095
        %1608 = vst [vmem:[%s135 + $0xdf0] sm:$0xff] %v1096
        %1609 = vst [vmem:[%s135 + $0xdf8] sm:$0xff] %v1097
        %1610 = vst [vmem:[%s135 + $0xe00] sm:$0xff] %v1098
        %1611 = vst [vmem:[%s135 + $0xe08] sm:$0xff] %v1099
        %1612 = vst [vmem:[%s135 + $0xe10] sm:$0xff] %v1100
        %1613 = vst [vmem:[%s135 + $0xe18] sm:$0xff] %v1101
        %1614 = vst [vmem:[%s135 + $0xe20] sm:$0xff] %v1102
        %1615 = vst [vmem:[%s135 + $0xe28] sm:$0xff] %v1103
        %1616 = vst [vmem:[%s135 + $0xe30] sm:$0xff] %v1104
        %1617 = vst [vmem:[%s135 + $0xe38] sm:$0xff] %v1105
        %1618 = vst [vmem:[%s135 + $0xe40] sm:$0xff] %v1106
        %1619 = vst [vmem:[%s135 + $0xe48] sm:$0xff] %v1107
        %1620 = vst [vmem:[%s135 + $0xe50] sm:$0xff] %v1108
        %1621 = vst [vmem:[%s135 + $0xe58] sm:$0xff] %v1109
        %1622 = vst [vmem:[%s135 + $0xe60] sm:$0xff] %v1110
        %1623 = vst [vmem:[%s135 + $0xe68] sm:$0xff] %v1111
        %1624 = vst [vmem:[%s135 + $0xe70] sm:$0xff] %v1112
        %1625 = vst [vmem:[%s135 + $0xe78] sm:$0xff] %v1113
        %1626 = vst [vmem:[%s135 + $0xe80] sm:$0xff] %v1114
        %1627 = vst [vmem:[%s135 + $0xe88] sm:$0xff] %v1115
        %1628 = vst [vmem:[%s135 + $0xe90] sm:$0xff] %v1116
        %1629 = vst [vmem:[%s135 + $0xe98] sm:$0xff] %v1117
        %1630 = vst [vmem:[%s135 + $0xea0] sm:$0xff] %v1118
        %1631 = vst [vmem:[%s135 + $0xea8] sm:$0xff] %v1119
        %1632 = vst [vmem:[%s135 + $0xeb0] sm:$0xff] %v1120
        %1633 = vst [vmem:[%s135 + $0xeb8] sm:$0xff] %v1121
        %1634 = vst [vmem:[%s135 + $0xec0] sm:$0xff] %v1122
        %1635 = vst [vmem:[%s135 + $0xec8] sm:$0xff] %v1123
        %1636 = vst [vmem:[%s135 + $0xed0] sm:$0xff] %v1124
        %1637 = vst [vmem:[%s135 + $0xed8] sm:$0xff] %v1125
        %1638 = vst [vmem:[%s135 + $0xee0] sm:$0xff] %v1126
        %1639 = vst [vmem:[%s135 + $0xee8] sm:$0xff] %v1127
        %1640 = vst [vmem:[%s135 + $0xef0] sm:$0xff] %v1128
        %1641 = vst [vmem:[%s135 + $0xef8] sm:$0xff] %v1129
        %1642 = vst [vmem:[%s135 + $0xf00] sm:$0xff] %v1130
        %1643 = vst [vmem:[%s135 + $0xf08] sm:$0xff] %v1131
        %1644 = vst [vmem:[%s135 + $0xf10] sm:$0xff] %v1132
        %1645 = vst [vmem:[%s135 + $0xf18] sm:$0xff] %v1133
        %1646 = vst [vmem:[%s135 + $0xf20] sm:$0xff] %v1134
        %1647 = vst [vmem:[%s135 + $0xf28] sm:$0xff] %v1135
        %1648 = vst [vmem:[%s135 + $0xf30] sm:$0xff] %v1136
        %1649 = vst [vmem:[%s135 + $0xf38] sm:$0xff] %v1137
        %1650 = vst [vmem:[%s135 + $0xf40] sm:$0xff] %v1138
        %1651 = vst [vmem:[%s135 + $0xf48] sm:$0xff] %v1139
        %1652 = vst [vmem:[%s135 + $0xf50] sm:$0xff] %v1140
        %1653 = vst [vmem:[%s135 + $0xf58] sm:$0xff] %v1141
        %1654 = vst [vmem:[%s135 + $0xf60] sm:$0xff] %v1142
        %1655 = vst [vmem:[%s135 + $0xf68] sm:$0xff] %v1143
        %1656 = vst [vmem:[%s135 + $0xf70] sm:$0xff] %v1144
        %1657 = vst [vmem:[%s135 + $0xf78] sm:$0xff] %v1145
        %1658 = vst [vmem:[%s135 + $0xf80] sm:$0xff] %v1146
        %1659 = vst [vmem:[%s135 + $0xf88] sm:$0xff] %v1147
        %1660 = vst [vmem:[%s135 + $0xf90] sm:$0xff] %v1148
        %1661 = vst [vmem:[%s135 + $0xf98] sm:$0xff] %v1149
        %1662 = vst [vmem:[%s135 + $0xfa0] sm:$0xff] %v1150
        %1663 = vst [vmem:[%s135 + $0xfa8] sm:$0xff] %v1151
        %1664 = vst [vmem:[%s135 + $0xfb0] sm:$0xff] %v1152
        %1665 = vst [vmem:[%s135 + $0xfb8] sm:$0xff] %v1153
        %1666 = vst [vmem:[%s135 + $0xfc0] sm:$0xff] %v1154
        %1667 = vst [vmem:[%s135 + $0xfc8] sm:$0xff] %v1155
        %1668 = vst [vmem:[%s135 + $0xfd0] sm:$0xff] %v1156
        %1669 = vst [vmem:[%s135 + $0xfd8] sm:$0xff] %v1157
        %1670 = vst [vmem:[%s135 + $0xfe0] sm:$0xff] %v1158
        %1671 = vst [vmem:[%s135 + $0xfe8] sm:$0xff] %v1159
        %1672 = vst [vmem:[%s135 + $0xff0] sm:$0xff] %v1160
        %1673 = vst [vmem:[%s135 + $0xff8] sm:$0xff] %v1161
        %s1674 = sand.u32 %s52, 1
        %s1675 = scalar_lea.sflag [#allocation4], %s1674
        %s1676 = sand.u32 %s52, 1
        %s1677 = smul.addr %s1676, 4096
        %s1678 = scalar_lea.vmem [#allocation5], %s1677
        // Predicated region
        $region29: #{tpu_custom_call.1} parent=23 // pred_check
          %p1679 = pneg %p62
        $region30: #{tpu_custom_call.1} parent=23 // pred_check_branch
          %1681 = sbr.rel (%p1679) target = $region32
        $region31: #{tpu_custom_call.1} parent=23 // pred_region
          %s1682 = smul.u32 64, %s18
          %s1684 = ssub.s32 65536, 65536
          %1685 = vsyncadd %s1675, %s1684
          %s1686 = smul.addr %s1682, 8
          %s1687 = smul.addr %s1686, 128
          %s1688 = scalar_lea.hbm %s1, %s1687
          %s1689 = sshll.u32 %s1678, 4
          %s1690 = int_to_ptr.vmem [resolvable:$true] %s1689
          %1695 = dma.vmem_to_hbm [thread:$0]  %s1690, 65536, %s1688, %s1675, 1024, 1024, 64
        $region32: #{tpu_custom_call.1} parent=23 // pred_fallthru
          _
      $region24: #{tpu_custom_call.1} parent=5 // pred_fallthru
        _
      %p1696 = scmp.le.s32.totalorder 2, %s13
      // Predicated region
      $region33: #{tpu_custom_call.1} parent=5 // pred_check
        %p1697 = pneg %p1696
      $region34: #{tpu_custom_call.1} parent=5 // pred_check_branch
        %1699 = sbr.rel (%p1697) target = $region36
      $region35: #{tpu_custom_call.1} parent=5 // pred_region
        %s1700 = ssub.s32 %s13, 2
        // Predicated region
        $region37: #{tpu_custom_call.1} parent=35 // pred_check
          %p1701 = pneg %p68
        $region38: #{tpu_custom_call.1} parent=35 // pred_check_branch
          %1703 = sbr.rel (%p1701) target = $region40
        $region39: #{tpu_custom_call.1} parent=35 // pred_region
          %s1704 = sand.u32 %s53, 1
          %s1705 = scalar_lea.sflag [#allocation4], %s1704
          %s1706 = sand.u32 %s53, 1
          %s1707 = smul.addr %s1706, 4096
          %s1708 = scalar_lea.vmem [#allocation5], %s1707
          %1709 = dma.done %s1705, 65536
        $region40: #{tpu_custom_call.1} parent=35 // pred_fallthru
          _
      $region36: #{tpu_custom_call.1} parent=5 // pred_fallthru
        _
    $region6: #{tpu_custom_call.1} parent=1 // loop_footer
      %s17 = sadd.s32 1, %s13
    $region7: #{tpu_custom_call.1} parent=1 // loop_footer_branch
      %12 = sbr.rel target = $region3
    $region8: #{tpu_custom_call.1} parent=1 // loop_exit
      _
    %1710 = vsyncpa [#allocation3], 1
    %s1711 = scalar_lea.sflag [#allocation3], 1
    %1712 = vsyncpa %s1711, 1
    %1713 = vsyncpa [#allocation4], 1
    %s1714 = scalar_lea.sflag [#allocation4], 1
    %1715 = vsyncpa %s1714, 1

</llo_original>
